<compile_context>
chip_gen: v7x
topology: tpu7x:2x2x1
jax: 0.10.0
libtpu: 0.0.40
codegen_flags: <defaults>
</compile_context>

<pallas_src>
import functools
import math

import jax
import jax.numpy as jnp
from jax.experimental import pallas as pl
from jax.experimental.pallas import tpu as pltpu


def _ffn_kernel(mask_ref, x_ref, w_in_ref, b_in_ref, w_dw_ref, b_dw_ref,
                w_out_ref, b_out_ref, o_ref, *, H, W, C2, compute_dtype):
    Hc = C2 // 2
    HW = H * W
    cd = compute_dtype

    # ---- hoisted per-block setup (masks arrive precomputed; tap splats once) ----
    m = mask_ref[...]                       # (4, HW) f32
    left_f = m[0:1, :].astype(cd)           # source col j-1 valid
    right_f = m[1:2, :].astype(cd)          # source col j+1 valid
    top_f = m[2:3, :].astype(cd)            # source row i-1 valid
    bot_f = m[3:4, :].astype(cd)            # source row i+1 valid

    w_in = w_in_ref[...]                    # (C2, C)  bf16
    b_in = b_in_ref[...]                    # (C2, 1)  f32
    wt = [w_dw_ref[k].astype(cd) for k in range(9)]   # nine (C2, 1) taps
    b_dw = b_dw_ref[...].astype(cd)         # (C2, 1)
    w_out = w_out_ref[...]                  # (C, Hc)  bf16
    b_out = b_out_ref[...]                  # (C, 1)   f32

    n_img = x_ref.shape[0]
    for b in range(n_img):                  # static unroll over images in this block
        # ---- project_in: 1x1 conv == (C2, C) @ (C, HW), bf16 MXU, f32 acc ----
        x = x_ref[b]                                                   # (C, HW) bf16
        y = (jnp.dot(w_in, x, preferred_element_type=jnp.float32)
             + b_in).astype(cd)                                        # (C2, HW)

        # ---- depthwise 3x3 (stride 1, zero pad 1): XLU rolls + VPU masks ----
        # pltpu.roll requires non-negative shifts: rolling by HW-1 / HW-W is the
        # circular equivalent of -1 / -W; wrapped lanes are zeroed by the masks.
        y_l = pltpu.roll(y, 1, axis=1) * left_f          # value at col j-1
        y_r = pltpu.roll(y, HW - 1, axis=1) * right_f    # value at col j+1

        acc = wt[3] * y_l + wt[4] * y + wt[5] * y_r + b_dw             # row i
        s_top = wt[0] * y_l + wt[1] * y + wt[2] * y_r                  # row i-1 taps
        acc = acc + pltpu.roll(s_top, W, axis=1) * top_f
        s_bot = wt[6] * y_l + wt[7] * y + wt[8] * y_r                  # row i+1 taps
        acc = acc + pltpu.roll(s_bot, HW - W, axis=1) * bot_f

        # ---- gate: sublane-aligned channel split + tanh GELU (EUP slot) ----
        x1 = acc[:Hc, :]
        x2 = acc[Hc:, :]
        z = jax.nn.gelu(x1, approximate=True) * x2

        # ---- project_out: 1x1 conv == (C, Hc) @ (Hc, HW) ----
        out = jnp.dot(w_out, z.astype(w_out.dtype),
                      preferred_element_type=jnp.float32) + b_out
        o_ref[b] = out.astype(o_ref.dtype)


def _device_kind():
    try:
        return jax.devices()[0].device_kind.lower()
    except Exception:
        return ""


def _default_vmem_limit_bytes():
    kind = _device_kind()
    if "7" in kind:
        return 48 * 1024 * 1024      # v7x: only 64 MiB VMEM per TensorCore
    if "v5" in kind or "v6" in kind:
        return 64 * 1024 * 1024      # 128 MiB physical: generous headroom
    return 32 * 1024 * 1024          # unknown backend / interpret: safe default


def _default_num_batch_blocks(batch):
    kind = _device_kind()
    if "7" in kind and batch % 2 == 0:
        return 2                     # v7x: 2 TensorCores -> keep both busy
    return 1                         # v5e/v6e: single TC -> fold batch, 1 step


def feedforward_pallas(x_cs, w_in_t, b_in, w_dw, b_dw, w_out_t, b_out, *, H, W,
                       out_dtype=jnp.bfloat16, compute_dtype=jnp.float32,
                       num_batch_blocks=None, vmem_limit_bytes=None):
    """x_cs: (B, C, H*W) bf16 (natively NCHW, spatial flattened).

    out_dtype:        bf16 default (halves the dominant HBM writeback term).
    compute_dtype:    f32 default; use jnp.bfloat16 on v6e/v7x to halve the
                      vreg/VMEM footprint of the dwconv+gate region (keep f32
                      on v5e: no bf16 VPU/EUP).
    num_batch_blocks: grid size over batch; 1 = whole batch in one pipeline
                      step (best on single-TC v5e/v6e), 2 keeps both v7x TCs busy.
    """
    B, C, HW = x_cs.shape
    C2 = w_in_t.shape[0]
    Hc = C2 // 2
    assert HW == H * W
    assert C2 % 8 == 0 and Hc % 8 == 0, "gate split must be sublane-aligned"

    if num_batch_blocks is None:
        num_batch_blocks = _default_num_batch_blocks(B)
    if B % num_batch_blocks != 0:
        num_batch_blocks = 1
    B_blk = B // num_batch_blocks
    if vmem_limit_bytes is None:
        vmem_limit_bytes = _default_vmem_limit_bytes()

    # Spatial-validity masks hoisted out of the kernel (identical every step).
    s_idx = jnp.arange(HW, dtype=jnp.int32)
    col = s_idx % W
    masks = jnp.stack([
        col >= 1,                 # left  neighbour (col j-1) exists
        col <= W - 2,             # right neighbour (col j+1) exists
        s_idx >= W,               # top   neighbour (row i-1) exists
        s_idx < (H - 1) * W,      # bottom neighbour (row i+1) exists
    ]).astype(jnp.float32)        # (4, HW)

    kernel = functools.partial(_ffn_kernel, H=H, W=W, C2=C2,
                               compute_dtype=compute_dtype)

    flops = (2 * B * HW * C * C2          # project_in
             + 2 * 9 * B * HW * C2        # depthwise 3x3
             + 3 * B * HW * Hc            # gate
             + 2 * B * HW * Hc * C)       # project_out
    bytes_accessed = int(
        x_cs.size * x_cs.dtype.itemsize
        + B * C * HW * jnp.dtype(out_dtype).itemsize
        + w_in_t.size * 2 + w_out_t.size * 2
        + (b_in.size + w_dw.size + b_dw.size + b_out.size) * 4
        + masks.size * 4)

    # TODO(synk): for production H,W (e.g. 256x256, C2=768) add H-row tiling
    # with a 1-row halo, chunk the dwconv lane axis with an unrolled fori_loop,
    # and size the row tile separately for v7x's 64 MiB VMEM vs 128 MiB on
    # v5e/v6e (keeping a >=2-way "parallel" axis on v7x).
    return pl.pallas_call(
        kernel,
        out_shape=jax.ShapeDtypeStruct((B, C, HW), out_dtype),
        grid_spec=pltpu.PrefetchScalarGridSpec(
            num_scalar_prefetch=0,
            grid=(num_batch_blocks,),
            in_specs=[
                pl.BlockSpec((4, HW), lambda g: (0, 0)),            # edge masks
                pl.BlockSpec((B_blk, C, HW), lambda g: (g, 0, 0)),  # x (C-as-sublanes)
                pl.BlockSpec((C2, C), lambda g: (0, 0)),            # w_in^T (bf16)
                pl.BlockSpec((C2, 1), lambda g: (0, 0)),            # b_in
                pl.BlockSpec((9, C2, 1), lambda g: (0, 0, 0)),      # dw taps
                pl.BlockSpec((C2, 1), lambda g: (0, 0)),            # b_dw
                pl.BlockSpec((C, Hc), lambda g: (0, 0)),            # w_out^T (bf16)
                pl.BlockSpec((C, 1), lambda g: (0, 0)),             # b_out
            ],
            out_specs=pl.BlockSpec((B_blk, C, HW), lambda g: (g, 0, 0)),
        ),
        compiler_params=pltpu.CompilerParams(
            dimension_semantics=("parallel",),
            vmem_limit_bytes=vmem_limit_bytes,
        ),
        cost_estimate=pl.CostEstimate(
            flops=flops,
            transcendentals=B * HW * Hc,
            bytes_accessed=bytes_accessed,
        ),
    )(masks, x_cs, w_in_t, b_in, w_dw, b_dw, w_out_t, b_out)


def feedforward_reference(x_cs, w_in_t, b_in, w_dw, b_dw, w_out_t, b_out, *, H, W):
    """Pure-JAX reference matching the PyTorch module (exact erf GELU, f32 out)."""
    B, C, HW = x_cs.shape
    C2 = w_in_t.shape[0]
    Hc = C2 // 2
    y = jnp.einsum('dc,bcs->bds', w_in_t, x_cs,
                   preferred_element_type=jnp.float32) + b_in[None]
    y = y.reshape(B, C2, H, W)
    ypad = jnp.pad(y, ((0, 0), (0, 0), (1, 1), (1, 1)))
    dw = jnp.zeros_like(y)
    for di in range(3):
        for dj in range(3):
            k = di * 3 + dj
            dw = dw + ypad[:, :, di:di + H, dj:dj + W] * w_dw[k].reshape(1, C2, 1, 1)
    dw = dw + b_dw.reshape(1, C2, 1, 1)
    x1, x2 = dw[:, :Hc], dw[:, Hc:]
    z = jax.nn.gelu(x1, approximate=False) * x2
    z = z.reshape(B, Hc, HW).astype(jnp.bfloat16)
    out = jnp.einsum('cd,bds->bcs', w_out_t, z,
                     preferred_element_type=jnp.float32) + b_out[None]
    return out


if __name__ == "__main__":
    # Module config: dim=8, ffn_expansion_factor=2 -> hidden=16, bias=True
    B, dim, H, W = 2, 8, 16, 16
    ffn_expansion_factor = 2.0
    hidden = int(dim * ffn_expansion_factor)      # 16
    C2 = hidden * 2                               # 32
    HW = H * W

    key = jax.random.PRNGKey(0)
    k = jax.random.split(key, 8)

    # Input in PyTorch NCHW convention (kernel layout is natively NCHW).
    x_nchw = jax.random.normal(k[0], (B, dim, H, W), dtype=jnp.float32)

    # Parameters in PyTorch Conv2d layouts, then repacked for the kernel.
    w_in_pt = jax.random.normal(k[1], (C2, dim, 1, 1), jnp.float32) * (1.0 / math.sqrt(dim))
    b_in_pt = jax.random.normal(k[2], (C2,), jnp.float32) * 0.1
    w_dw_pt = jax.random.normal(k[3], (C2, 1, 3, 3), jnp.float32) * (1.0 / 3.0)
    b_dw_pt = jax.random.normal(k[4], (C2,), jnp.float32) * 0.1
    w_out_pt = jax.random.normal(k[5], (dim, hidden, 1, 1), jnp.float32) * (1.0 / math.sqrt(hidden))
    b_out_pt = jax.random.normal(k[6], (dim,), jnp.float32) * 0.1

    # Repack: channels-as-sublanes, spatial-as-lanes; matmul weights cast to bf16.
    x_cs = x_nchw.reshape(B, dim, HW).astype(jnp.bfloat16)            # (B, C, HW)
    w_in_t = w_in_pt[:, :, 0, 0].astype(jnp.bfloat16)                 # (C2, C)
    b_in = b_in_pt.reshape(C2, 1)
    # (C2,1,3,3) -> (9, C2, 1), row-major tap order k = di*3 + dj
    w_dw = jnp.transpose(w_dw_pt[:, 0].reshape(C2, 9), (1, 0)).reshape(9, C2, 1)
    b_dw = b_dw_pt.reshape(C2, 1)
    w_out_t = w_out_pt[:, :, 0, 0].astype(jnp.bfloat16)               # (C, Hc)
    b_out = b_out_pt.reshape(dim, 1)

    out = feedforward_pallas(x_cs, w_in_t, b_in, w_dw, b_dw, w_out_t, b_out, H=H, W=W)
    out = jax.block_until_ready(out)

    ref = feedforward_reference(x_cs, w_in_t, b_in, w_dw, b_dw, w_out_t, b_out, H=H, W=W)
    assert out.shape == (B, dim, HW)
    out_f32 = out.astype(jnp.float32)
    max_err = jnp.max(jnp.abs(out_f32 - ref))
    # Tolerance covers bf16 output rounding + tanh-vs-erf GELU delta.
    assert jnp.allclose(out_f32, ref, atol=3e-2, rtol=3e-2), f"max abs err {max_err}"

    # Already NCHW: just unflatten spatial (no transpose needed).
    out_nchw = out_f32.reshape(B, dim, H, W)
    jax.block_until_ready(out_nchw)
    print("KERNEL_OK")
</pallas_src>

<mosaic_0001>
module attributes {stable_mosaic.version = 11 : i64} {
  func.func @_ffn_kernel(%arg0: i32, %arg1: memref<4x256xf32, #tpu.memory_space<vmem>>, %arg2: memref<2x8x256xbf16, #tpu.memory_space<vmem>>, %arg3: memref<32x8xbf16, #tpu.memory_space<vmem>>, %arg4: memref<32x1xf32, #tpu.memory_space<vmem>>, %arg5: memref<9x32x1xf32, #tpu.memory_space<vmem>>, %arg6: memref<32x1xf32, #tpu.memory_space<vmem>>, %arg7: memref<8x16xbf16, #tpu.memory_space<vmem>>, %arg8: memref<8x1xf32, #tpu.memory_space<vmem>>, %arg9: memref<2x8x256xbf16, #tpu.memory_space<vmem>>) attributes {dimension_semantics = [#tpu.dimension_semantics<parallel>], iteration_bounds = array<i64: 1>, scalar_prefetch = 0 : i64, scratch_operands = 0 : i64, tpu.core_type = #tpu.core_type<tc>, window_params = [{pipeline_mode = #tpu.pipeline_mode<synchronous>, transform_indices = @transform_0, window_bounds = array<i64: 4, 256>}, {transform_indices = @transform_1, window_bounds = array<i64: 2, 8, 256>}, {pipeline_mode = #tpu.pipeline_mode<synchronous>, transform_indices = @transform_2, window_bounds = array<i64: 32, 8>}, {pipeline_mode = #tpu.pipeline_mode<synchronous>, transform_indices = @transform_3, window_bounds = array<i64: 32, 1>}, {pipeline_mode = #tpu.pipeline_mode<synchronous>, transform_indices = @transform_4, window_bounds = array<i64: 9, 32, 1>}, {pipeline_mode = #tpu.pipeline_mode<synchronous>, transform_indices = @transform_5, window_bounds = array<i64: 32, 1>}, {pipeline_mode = #tpu.pipeline_mode<synchronous>, transform_indices = @transform_6, window_bounds = array<i64: 8, 16>}, {pipeline_mode = #tpu.pipeline_mode<synchronous>, transform_indices = @transform_7, window_bounds = array<i64: 8, 1>}, {transform_indices = @transform_8, window_bounds = array<i64: 2, 8, 256>}]} {
    %c0 = arith.constant 0 : index
    %c0_0 = arith.constant 0 : index
    %0 = vector.load %arg1[%c0, %c0_0] : memref<4x256xf32, #tpu.memory_space<vmem>>, vector<4x256xf32>
    %1 = vector.extract_strided_slice %0 {offsets = [0, 0], sizes = [1, 256], strides = [1, 1]} : vector<4x256xf32> to vector<1x256xf32>
    %2 = vector.extract_strided_slice %0 {offsets = [1, 0], sizes = [1, 256], strides = [1, 1]} : vector<4x256xf32> to vector<1x256xf32>
    %3 = vector.extract_strided_slice %0 {offsets = [2, 0], sizes = [1, 256], strides = [1, 1]} : vector<4x256xf32> to vector<1x256xf32>
    %4 = vector.extract_strided_slice %0 {offsets = [3, 0], sizes = [1, 256], strides = [1, 1]} : vector<4x256xf32> to vector<1x256xf32>
    %c0_1 = arith.constant 0 : index
    %c0_2 = arith.constant 0 : index
    %5 = vector.load %arg3[%c0_1, %c0_2] : memref<32x8xbf16, #tpu.memory_space<vmem>>, vector<32x8xbf16>
    %c0_3 = arith.constant 0 : index
    %c0_4 = arith.constant 0 : index
    %6 = vector.load %arg4[%c0_3, %c0_4] : memref<32x1xf32, #tpu.memory_space<vmem>>, vector<32x1xf32>
    %c0_5 = arith.constant 0 : index
    %c0_6 = arith.constant 0 : index
    %c0_7 = arith.constant 0 : index
    %7 = vector.load %arg5[%c0_5, %c0_6, %c0_7] : memref<9x32x1xf32, #tpu.memory_space<vmem>>, vector<1x32x1xf32>
    %8 = vector.shape_cast %7 : vector<1x32x1xf32> to vector<32x1xf32>
    %c1 = arith.constant 1 : index
    %c0_8 = arith.constant 0 : index
    %c0_9 = arith.constant 0 : index
    %9 = vector.load %arg5[%c1, %c0_8, %c0_9] : memref<9x32x1xf32, #tpu.memory_space<vmem>>, vector<1x32x1xf32>
    %10 = vector.shape_cast %9 : vector<1x32x1xf32> to vector<32x1xf32>
    %c2 = arith.constant 2 : index
    %c0_10 = arith.constant 0 : index
    %c0_11 = arith.constant 0 : index
    %11 = vector.load %arg5[%c2, %c0_10, %c0_11] : memref<9x32x1xf32, #tpu.memory_space<vmem>>, vector<1x32x1xf32>
    %12 = vector.shape_cast %11 : vector<1x32x1xf32> to vector<32x1xf32>
    %c3 = arith.constant 3 : index
    %c0_12 = arith.constant 0 : index
    %c0_13 = arith.constant 0 : index
    %13 = vector.load %arg5[%c3, %c0_12, %c0_13] : memref<9x32x1xf32, #tpu.memory_space<vmem>>, vector<1x32x1xf32>
    %14 = vector.shape_cast %13 : vector<1x32x1xf32> to vector<32x1xf32>
    %c4 = arith.constant 4 : index
    %c0_14 = arith.constant 0 : index
    %c0_15 = arith.constant 0 : index
    %15 = vector.load %arg5[%c4, %c0_14, %c0_15] : memref<9x32x1xf32, #tpu.memory_space<vmem>>, vector<1x32x1xf32>
    %16 = vector.shape_cast %15 : vector<1x32x1xf32> to vector<32x1xf32>
    %c5 = arith.constant 5 : index
    %c0_16 = arith.constant 0 : index
    %c0_17 = arith.constant 0 : index
    %17 = vector.load %arg5[%c5, %c0_16, %c0_17] : memref<9x32x1xf32, #tpu.memory_space<vmem>>, vector<1x32x1xf32>
    %18 = vector.shape_cast %17 : vector<1x32x1xf32> to vector<32x1xf32>
    %c6 = arith.constant 6 : index
    %c0_18 = arith.constant 0 : index
    %c0_19 = arith.constant 0 : index
    %19 = vector.load %arg5[%c6, %c0_18, %c0_19] : memref<9x32x1xf32, #tpu.memory_space<vmem>>, vector<1x32x1xf32>
    %20 = vector.shape_cast %19 : vector<1x32x1xf32> to vector<32x1xf32>
    %c7 = arith.constant 7 : index
    %c0_20 = arith.constant 0 : index
    %c0_21 = arith.constant 0 : index
    %21 = vector.load %arg5[%c7, %c0_20, %c0_21] : memref<9x32x1xf32, #tpu.memory_space<vmem>>, vector<1x32x1xf32>
    %22 = vector.shape_cast %21 : vector<1x32x1xf32> to vector<32x1xf32>
    %c8 = arith.constant 8 : index
    %c0_22 = arith.constant 0 : index
    %c0_23 = arith.constant 0 : index
    %23 = vector.load %arg5[%c8, %c0_22, %c0_23] : memref<9x32x1xf32, #tpu.memory_space<vmem>>, vector<1x32x1xf32>
    %24 = vector.shape_cast %23 : vector<1x32x1xf32> to vector<32x1xf32>
    %c0_24 = arith.constant 0 : index
    %c0_25 = arith.constant 0 : index
    %25 = vector.load %arg6[%c0_24, %c0_25] : memref<32x1xf32, #tpu.memory_space<vmem>>, vector<32x1xf32>
    %c0_26 = arith.constant 0 : index
    %c0_27 = arith.constant 0 : index
    %26 = vector.load %arg7[%c0_26, %c0_27] : memref<8x16xbf16, #tpu.memory_space<vmem>>, vector<8x16xbf16>
    %c0_28 = arith.constant 0 : index
    %c0_29 = arith.constant 0 : index
    %27 = vector.load %arg8[%c0_28, %c0_29] : memref<8x1xf32, #tpu.memory_space<vmem>>, vector<8x1xf32>
    %c0_30 = arith.constant 0 : index
    %c0_31 = arith.constant 0 : index
    %c0_32 = arith.constant 0 : index
    %28 = vector.load %arg2[%c0_30, %c0_31, %c0_32] : memref<2x8x256xbf16, #tpu.memory_space<vmem>>, vector<1x8x256xbf16>
    %29 = vector.shape_cast %28 : vector<1x8x256xbf16> to vector<8x256xbf16>
    %cst = arith.constant dense<0.000000e+00> : vector<32x256xf32>
    %30 = tpu.matmul %5, %29, %cst {dimension_numbers = #tpu.dot_dimension_numbers<[1], [0], [0], [1], [0, 0, 1, 1], [], []>} : vector<32x8xbf16>, vector<8x256xbf16>, vector<32x256xf32> -> vector<32x256xf32>
    %31 = vector.broadcast %6 : vector<32x1xf32> to vector<32x256xf32>
    %32 = arith.addf %30, %31 : vector<32x256xf32>
    %c1_i32 = arith.constant 1 : i32
    %33 = tpu.dynamic_rotate %32 by %c1_i32 dim 1 : vector<32x256xf32>, i32 -> vector<32x256xf32>
    %34 = vector.broadcast %1 : vector<1x256xf32> to vector<32x256xf32>
    %35 = arith.mulf %33, %34 : vector<32x256xf32>
    %c255_i32 = arith.constant 255 : i32
    %36 = tpu.dynamic_rotate %32 by %c255_i32 dim 1 : vector<32x256xf32>, i32 -> vector<32x256xf32>
    %37 = vector.broadcast %2 : vector<1x256xf32> to vector<32x256xf32>
    %38 = arith.mulf %36, %37 : vector<32x256xf32>
    %39 = vector.broadcast %14 : vector<32x1xf32> to vector<32x256xf32>
    %40 = arith.mulf %39, %35 : vector<32x256xf32>
    %41 = vector.broadcast %16 : vector<32x1xf32> to vector<32x256xf32>
    %42 = arith.mulf %41, %32 : vector<32x256xf32>
    %43 = arith.addf %40, %42 : vector<32x256xf32>
    %44 = vector.broadcast %18 : vector<32x1xf32> to vector<32x256xf32>
    %45 = arith.mulf %44, %38 : vector<32x256xf32>
    %46 = arith.addf %43, %45 : vector<32x256xf32>
    %47 = vector.broadcast %25 : vector<32x1xf32> to vector<32x256xf32>
    %48 = arith.addf %46, %47 : vector<32x256xf32>
    %49 = vector.broadcast %8 : vector<32x1xf32> to vector<32x256xf32>
    %50 = arith.mulf %49, %35 : vector<32x256xf32>
    %51 = vector.broadcast %10 : vector<32x1xf32> to vector<32x256xf32>
    %52 = arith.mulf %51, %32 : vector<32x256xf32>
    %53 = arith.addf %50, %52 : vector<32x256xf32>
    %54 = vector.broadcast %12 : vector<32x1xf32> to vector<32x256xf32>
    %55 = arith.mulf %54, %38 : vector<32x256xf32>
    %56 = arith.addf %53, %55 : vector<32x256xf32>
    %c16_i32 = arith.constant 16 : i32
    %57 = tpu.dynamic_rotate %56 by %c16_i32 dim 1 : vector<32x256xf32>, i32 -> vector<32x256xf32>
    %58 = vector.broadcast %3 : vector<1x256xf32> to vector<32x256xf32>
    %59 = arith.mulf %57, %58 : vector<32x256xf32>
    %60 = arith.addf %48, %59 : vector<32x256xf32>
    %61 = vector.broadcast %20 : vector<32x1xf32> to vector<32x256xf32>
    %62 = arith.mulf %61, %35 : vector<32x256xf32>
    %63 = vector.broadcast %22 : vector<32x1xf32> to vector<32x256xf32>
    %64 = arith.mulf %63, %32 : vector<32x256xf32>
    %65 = arith.addf %62, %64 : vector<32x256xf32>
    %66 = vector.broadcast %24 : vector<32x1xf32> to vector<32x256xf32>
    %67 = arith.mulf %66, %38 : vector<32x256xf32>
    %68 = arith.addf %65, %67 : vector<32x256xf32>
    %c240_i32 = arith.constant 240 : i32
    %69 = tpu.dynamic_rotate %68 by %c240_i32 dim 1 : vector<32x256xf32>, i32 -> vector<32x256xf32>
    %70 = vector.broadcast %4 : vector<1x256xf32> to vector<32x256xf32>
    %71 = arith.mulf %69, %70 : vector<32x256xf32>
    %72 = arith.addf %60, %71 : vector<32x256xf32>
    %73 = vector.extract_strided_slice %72 {offsets = [0, 0], sizes = [16, 256], strides = [1, 1]} : vector<32x256xf32> to vector<16x256xf32>
    %74 = vector.extract_strided_slice %72 {offsets = [16, 0], sizes = [16, 256], strides = [1, 1]} : vector<32x256xf32> to vector<16x256xf32>
    %75 = arith.mulf %73, %73 : vector<16x256xf32>
    %76 = arith.mulf %73, %75 : vector<16x256xf32>
    %cst_33 = arith.constant 4.471500e-02 : f32
    %77 = vector.broadcast %cst_33 : f32 to vector<16x256xf32>
    %78 = arith.mulf %77, %76 : vector<16x256xf32>
    %79 = arith.addf %73, %78 : vector<16x256xf32>
    %cst_34 = arith.constant 0.797884583 : f32
    %80 = vector.broadcast %cst_34 : f32 to vector<16x256xf32>
    %81 = arith.mulf %80, %79 : vector<16x256xf32>
    %82 = math.tanh %81 : vector<16x256xf32>
    %cst_35 = arith.constant 1.000000e+00 : f32
    %83 = vector.broadcast %cst_35 : f32 to vector<16x256xf32>
    %84 = arith.addf %83, %82 : vector<16x256xf32>
    %cst_36 = arith.constant 5.000000e-01 : f32
    %85 = vector.broadcast %cst_36 : f32 to vector<16x256xf32>
    %86 = arith.mulf %85, %84 : vector<16x256xf32>
    %87 = arith.mulf %73, %86 : vector<16x256xf32>
    %88 = arith.mulf %87, %74 : vector<16x256xf32>
    %89 = arith.truncf %88 : vector<16x256xf32> to vector<16x256xbf16>
    %cst_37 = arith.constant dense<0.000000e+00> : vector<8x256xf32>
    %90 = tpu.matmul %26, %89, %cst_37 {dimension_numbers = #tpu.dot_dimension_numbers<[1], [0], [0], [1], [0, 0, 1, 1], [], []>} : vector<8x16xbf16>, vector<16x256xbf16>, vector<8x256xf32> -> vector<8x256xf32>
    %91 = vector.broadcast %27 : vector<8x1xf32> to vector<8x256xf32>
    %92 = arith.addf %90, %91 : vector<8x256xf32>
    %93 = arith.truncf %92 : vector<8x256xf32> to vector<8x256xbf16>
    %c0_38 = arith.constant 0 : index
    %c0_39 = arith.constant 0 : index
    %c0_40 = arith.constant 0 : index
    %94 = vector.load %arg9[%c0_38, %c0_39, %c0_40] : memref<2x8x256xbf16, #tpu.memory_space<vmem>>, vector<1x8x256xbf16>
    %95 = vector.shape_cast %94 : vector<1x8x256xbf16> to vector<8x256xbf16>
    %96 = vector.shape_cast %93 : vector<8x256xbf16> to vector<1x8x256xbf16>
    tpu.vector_store %arg9[%c0_38, %c0_39, %c0_40], %96 {strides = array<i32>} : memref<2x8x256xbf16, #tpu.memory_space<vmem>>, vector<1x8x256xbf16>,
    %c1_41 = arith.constant 1 : index
    %c0_42 = arith.constant 0 : index
    %c0_43 = arith.constant 0 : index
    %97 = vector.load %arg2[%c1_41, %c0_42, %c0_43] : memref<2x8x256xbf16, #tpu.memory_space<vmem>>, vector<1x8x256xbf16>
    %98 = vector.shape_cast %97 : vector<1x8x256xbf16> to vector<8x256xbf16>
    %cst_44 = arith.constant dense<0.000000e+00> : vector<32x256xf32>
    %99 = tpu.matmul %5, %98, %cst_44 {dimension_numbers = #tpu.dot_dimension_numbers<[1], [0], [0], [1], [0, 0, 1, 1], [], []>} : vector<32x8xbf16>, vector<8x256xbf16>, vector<32x256xf32> -> vector<32x256xf32>
    %100 = vector.broadcast %6 : vector<32x1xf32> to vector<32x256xf32>
    %101 = arith.addf %99, %100 : vector<32x256xf32>
    %c1_i32_45 = arith.constant 1 : i32
    %102 = tpu.dynamic_rotate %101 by %c1_i32_45 dim 1 : vector<32x256xf32>, i32 -> vector<32x256xf32>
    %103 = vector.broadcast %1 : vector<1x256xf32> to vector<32x256xf32>
    %104 = arith.mulf %102, %103 : vector<32x256xf32>
    %c255_i32_46 = arith.constant 255 : i32
    %105 = tpu.dynamic_rotate %101 by %c255_i32_46 dim 1 : vector<32x256xf32>, i32 -> vector<32x256xf32>
    %106 = vector.broadcast %2 : vector<1x256xf32> to vector<32x256xf32>
    %107 = arith.mulf %105, %106 : vector<32x256xf32>
    %108 = vector.broadcast %14 : vector<32x1xf32> to vector<32x256xf32>
    %109 = arith.mulf %108, %104 : vector<32x256xf32>
    %110 = vector.broadcast %16 : vector<32x1xf32> to vector<32x256xf32>
    %111 = arith.mulf %110, %101 : vector<32x256xf32>
    %112 = arith.addf %109, %111 : vector<32x256xf32>
    %113 = vector.broadcast %18 : vector<32x1xf32> to vector<32x256xf32>
    %114 = arith.mulf %113, %107 : vector<32x256xf32>
    %115 = arith.addf %112, %114 : vector<32x256xf32>
    %116 = vector.broadcast %25 : vector<32x1xf32> to vector<32x256xf32>
    %117 = arith.addf %115, %116 : vector<32x256xf32>
    %118 = vector.broadcast %8 : vector<32x1xf32> to vector<32x256xf32>
    %119 = arith.mulf %118, %104 : vector<32x256xf32>
    %120 = vector.broadcast %10 : vector<32x1xf32> to vector<32x256xf32>
    %121 = arith.mulf %120, %101 : vector<32x256xf32>
    %122 = arith.addf %119, %121 : vector<32x256xf32>
    %123 = vector.broadcast %12 : vector<32x1xf32> to vector<32x256xf32>
    %124 = arith.mulf %123, %107 : vector<32x256xf32>
    %125 = arith.addf %122, %124 : vector<32x256xf32>
    %c16_i32_47 = arith.constant 16 : i32
    %126 = tpu.dynamic_rotate %125 by %c16_i32_47 dim 1 : vector<32x256xf32>, i32 -> vector<32x256xf32>
    %127 = vector.broadcast %3 : vector<1x256xf32> to vector<32x256xf32>
    %128 = arith.mulf %126, %127 : vector<32x256xf32>
    %129 = arith.addf %117, %128 : vector<32x256xf32>
    %130 = vector.broadcast %20 : vector<32x1xf32> to vector<32x256xf32>
    %131 = arith.mulf %130, %104 : vector<32x256xf32>
    %132 = vector.broadcast %22 : vector<32x1xf32> to vector<32x256xf32>
    %133 = arith.mulf %132, %101 : vector<32x256xf32>
    %134 = arith.addf %131, %133 : vector<32x256xf32>
    %135 = vector.broadcast %24 : vector<32x1xf32> to vector<32x256xf32>
    %136 = arith.mulf %135, %107 : vector<32x256xf32>
    %137 = arith.addf %134, %136 : vector<32x256xf32>
    %c240_i32_48 = arith.constant 240 : i32
    %138 = tpu.dynamic_rotate %137 by %c240_i32_48 dim 1 : vector<32x256xf32>, i32 -> vector<32x256xf32>
    %139 = vector.broadcast %4 : vector<1x256xf32> to vector<32x256xf32>
    %140 = arith.mulf %138, %139 : vector<32x256xf32>
    %141 = arith.addf %129, %140 : vector<32x256xf32>
    %142 = vector.extract_strided_slice %141 {offsets = [0, 0], sizes = [16, 256], strides = [1, 1]} : vector<32x256xf32> to vector<16x256xf32>
    %143 = vector.extract_strided_slice %141 {offsets = [16, 0], sizes = [16, 256], strides = [1, 1]} : vector<32x256xf32> to vector<16x256xf32>
    %144 = arith.mulf %142, %142 : vector<16x256xf32>
    %145 = arith.mulf %142, %144 : vector<16x256xf32>
    %cst_49 = arith.constant 4.471500e-02 : f32
    %146 = vector.broadcast %cst_49 : f32 to vector<16x256xf32>
    %147 = arith.mulf %146, %145 : vector<16x256xf32>
    %148 = arith.addf %142, %147 : vector<16x256xf32>
    %cst_50 = arith.constant 0.797884583 : f32
    %149 = vector.broadcast %cst_50 : f32 to vector<16x256xf32>
    %150 = arith.mulf %149, %148 : vector<16x256xf32>
    %151 = math.tanh %150 : vector<16x256xf32>
    %cst_51 = arith.constant 1.000000e+00 : f32
    %152 = vector.broadcast %cst_51 : f32 to vector<16x256xf32>
    %153 = arith.addf %152, %151 : vector<16x256xf32>
    %cst_52 = arith.constant 5.000000e-01 : f32
    %154 = vector.broadcast %cst_52 : f32 to vector<16x256xf32>
    %155 = arith.mulf %154, %153 : vector<16x256xf32>
    %156 = arith.mulf %142, %155 : vector<16x256xf32>
    %157 = arith.mulf %156, %143 : vector<16x256xf32>
    %158 = arith.truncf %157 : vector<16x256xf32> to vector<16x256xbf16>
    %cst_53 = arith.constant dense<0.000000e+00> : vector<8x256xf32>
    %159 = tpu.matmul %26, %158, %cst_53 {dimension_numbers = #tpu.dot_dimension_numbers<[1], [0], [0], [1], [0, 0, 1, 1], [], []>} : vector<8x16xbf16>, vector<16x256xbf16>, vector<8x256xf32> -> vector<8x256xf32>
    %160 = vector.broadcast %27 : vector<8x1xf32> to vector<8x256xf32>
    %161 = arith.addf %159, %160 : vector<8x256xf32>
    %162 = arith.truncf %161 : vector<8x256xf32> to vector<8x256xbf16>
    %c1_54 = arith.constant 1 : index
    %c0_55 = arith.constant 0 : index
    %c0_56 = arith.constant 0 : index
    %163 = vector.load %arg9[%c1_54, %c0_55, %c0_56] : memref<2x8x256xbf16, #tpu.memory_space<vmem>>, vector<1x8x256xbf16>
    %164 = vector.shape_cast %163 : vector<1x8x256xbf16> to vector<8x256xbf16>
    %165 = vector.shape_cast %162 : vector<8x256xbf16> to vector<1x8x256xbf16>
    tpu.vector_store %arg9[%c1_54, %c0_55, %c0_56], %165 {strides = array<i32>} : memref<2x8x256xbf16, #tpu.memory_space<vmem>>, vector<1x8x256xbf16>,
    return
  }
  func.func @transform_0(%arg0: i32) -> (i32, i32) {
    %c0_i32 = arith.constant 0 : i32
    %c0_i32_0 = arith.constant 0 : i32
    %c0_i32_1 = arith.constant 0 : i32
    return %c0_i32, %c0_i32_0 : i32, i32
  }
  func.func @transform_1(%arg0: i32) -> (i32, i32, i32) {
    %c0_i32 = arith.constant 0 : i32
    %c0_i32_0 = arith.constant 0 : i32
    %c0_i32_1 = arith.constant 0 : i32
    return %arg0, %c0_i32, %c0_i32_0 : i32, i32, i32
  }
  func.func @transform_2(%arg0: i32) -> (i32, i32) {
    %c0_i32 = arith.constant 0 : i32
    %c0_i32_0 = arith.constant 0 : i32
    %c0_i32_1 = arith.constant 0 : i32
    return %c0_i32, %c0_i32_0 : i32, i32
  }
  func.func @transform_3(%arg0: i32) -> (i32, i32) {
    %c0_i32 = arith.constant 0 : i32
    %c0_i32_0 = arith.constant 0 : i32
    %c0_i32_1 = arith.constant 0 : i32
    return %c0_i32, %c0_i32_0 : i32, i32
  }
  func.func @transform_4(%arg0: i32) -> (i32, i32, i32) {
    %c0_i32 = arith.constant 0 : i32
    %c0_i32_0 = arith.constant 0 : i32
    %c0_i32_1 = arith.constant 0 : i32
    %c0_i32_2 = arith.constant 0 : i32
    return %c0_i32, %c0_i32_0, %c0_i32_1 : i32, i32, i32
  }
  func.func @transform_5(%arg0: i32) -> (i32, i32) {
    %c0_i32 = arith.constant 0 : i32
    %c0_i32_0 = arith.constant 0 : i32
    %c0_i32_1 = arith.constant 0 : i32
    return %c0_i32, %c0_i32_0 : i32, i32
  }
  func.func @transform_6(%arg0: i32) -> (i32, i32) {
    %c0_i32 = arith.constant 0 : i32
    %c0_i32_0 = arith.constant 0 : i32
    %c0_i32_1 = arith.constant 0 : i32
    return %c0_i32, %c0_i32_0 : i32, i32
  }
  func.func @transform_7(%arg0: i32) -> (i32, i32) {
    %c0_i32 = arith.constant 0 : i32
    %c0_i32_0 = arith.constant 0 : i32
    %c0_i32_1 = arith.constant 0 : i32
    return %c0_i32, %c0_i32_0 : i32, i32
  }
  func.func @transform_8(%arg0: i32) -> (i32, i32, i32) {
    %c0_i32 = arith.constant 0 : i32
    %c0_i32_0 = arith.constant 0 : i32
    %c0_i32_1 = arith.constant 0 : i32
    return %arg0, %c0_i32, %c0_i32_0 : i32, i32, i32
  }
}

</mosaic_0001>

<llo_original>
// kernel: tpu_custom_call.1
$region0: #{tpu_custom_call.1}
  #allocation0 [shape = 'u32[]', space=smem, size = 0x4, offset = 0x4, fixed_abs, tag = 'smem constant byte address 0x4 - core index']
  #allocation1 [shape = 'u32[144,128]{1,0:T(1,128)}', space=vmem, size = 0x12000, scoped, tag = 'internal scratch']
  %s0 = inlined_call_operand.vmem [shape: f32[4,256], index: 0, kind: input, shape index: {}]
  %s1 = inlined_call_operand.vmem [shape: bf16[2,8,256], index: 1, kind: input, shape index: {}]
  %s2 = inlined_call_operand.vmem [shape: bf16[32,8], index: 2, kind: input, shape index: {}]
  %s3 = inlined_call_operand.vmem [shape: f32[32,1], index: 3, kind: input, shape index: {}]
  %s4 = inlined_call_operand.vmem [shape: f32[9,32,1], index: 4, kind: input, shape index: {}]
  %s5 = inlined_call_operand.vmem [shape: f32[32,1], index: 5, kind: input, shape index: {}]
  %s6 = inlined_call_operand.vmem [shape: bf16[8,16], index: 6, kind: input, shape index: {}]
  %s7 = inlined_call_operand.vmem [shape: f32[8,1], index: 7, kind: input, shape index: {}]
  %s8 = inlined_call_operand.hbm [shape: bf16[2,8,256], index: 8, kind: output, shape index: {}]
  %s9 = sld [smem:[#allocation0]]
  $region42: #{tpu_custom_call.1} parent=0
    _
  %s11 = ssub.s32 1, %s9
  %s12 = scalar_select 0, %s11, %s9
  $region1: #{tpu_custom_call.1} parent=0
    #allocation2 [shape = 'u8[8192]{0}', space=vmem, size = 0x2000, scoped, tag = 'output window, operand 0, single buffered']
    #allocation3 [shape = 's32[1]{0}', space=sflag, size = 0x4, scoped, tag = 'scoped memory for tpu_custom_call.1']
    %13 = vsyncpa [#allocation3], 0
    // Predicated region
    $region2: #{tpu_custom_call.1} parent=1 // pred_check
      _
    $region3: #{tpu_custom_call.1} parent=1 // pred_check_branch
      %15 = sbr.rel (0) target = $region5
    $region4: #{tpu_custom_call.1} parent=1 // pred_region
      _
    $region5: #{tpu_custom_call.1} parent=1 // pred_fallthru
      _
    // Predicated region
    $region6: #{tpu_custom_call.1} parent=1 // pred_check
      _
    $region7: #{tpu_custom_call.1} parent=1 // pred_check_branch
      %17 = sbr.rel (0) target = $region9
    $region8: #{tpu_custom_call.1} parent=1 // pred_region
      _
    $region9: #{tpu_custom_call.1} parent=1 // pred_fallthru
      _
    // Predicated region
    $region10: #{tpu_custom_call.1} parent=1 // pred_check
      _
    $region11: #{tpu_custom_call.1} parent=1 // pred_check_branch
      %19 = sbr.rel (0) target = $region13
    $region12: #{tpu_custom_call.1} parent=1 // pred_region
      _
    $region13: #{tpu_custom_call.1} parent=1 // pred_fallthru
      _
    // Predicated region
    $region14: #{tpu_custom_call.1} parent=1 // pred_check
      _
    $region15: #{tpu_custom_call.1} parent=1 // pred_check_branch
      %21 = sbr.rel (0) target = $region17
    $region16: #{tpu_custom_call.1} parent=1 // pred_region
      _
    $region17: #{tpu_custom_call.1} parent=1 // pred_fallthru
      _
    // Predicated region
    $region18: #{tpu_custom_call.1} parent=1 // pred_check
      _
    $region19: #{tpu_custom_call.1} parent=1 // pred_check_branch
      %23 = sbr.rel (0) target = $region21
    $region20: #{tpu_custom_call.1} parent=1 // pred_region
      _
    $region21: #{tpu_custom_call.1} parent=1 // pred_fallthru
      _
    // Predicated region
    $region22: #{tpu_custom_call.1} parent=1 // pred_check
      _
    $region23: #{tpu_custom_call.1} parent=1 // pred_check_branch
      %25 = sbr.rel (0) target = $region25
    $region24: #{tpu_custom_call.1} parent=1 // pred_region
      _
    $region25: #{tpu_custom_call.1} parent=1 // pred_fallthru
      _
    // Predicated region
    $region26: #{tpu_custom_call.1} parent=1 // pred_check
      _
    $region27: #{tpu_custom_call.1} parent=1 // pred_check_branch
      %27 = sbr.rel (0) target = $region29
    $region28: #{tpu_custom_call.1} parent=1 // pred_region
      _
    $region29: #{tpu_custom_call.1} parent=1 // pred_fallthru
      _
    // Predicated region
    $region30: #{tpu_custom_call.1} parent=1 // pred_check
      _
    $region31: #{tpu_custom_call.1} parent=1 // pred_check_branch
      %29 = sbr.rel (0) target = $region33
    $region32: #{tpu_custom_call.1} parent=1 // pred_region
      _
    $region33: #{tpu_custom_call.1} parent=1 // pred_fallthru
      _
    %v31 = vld [vmem:[%s0] sm:$0xff]
    %v32 = vld [vmem:[%s2] sm:$0xf]
    %v33 = vld [vmem:[%s2 + $0x4] sm:$0xf]
    %v34 = vld [vmem:[%s2 + $0x8] sm:$0xf]
    %v35 = vld [vmem:[%s2 + $0xc] sm:$0xf]
    %v36 = vld [vmem:[%s3] sm:$0xff]
    %v37 = vld [vmem:[%s3 + $0x8] sm:$0xff]
    %v38 = vld [vmem:[%s3 + $0x10] sm:$0xff]
    %v39 = vld [vmem:[%s3 + $0x18] sm:$0xff]
    %v40 = vld [vmem:[%s4] sm:$0xff]
    %v41 = vld [vmem:[%s4 + $0x8] sm:$0xff]
    %v42 = vld [vmem:[%s4 + $0x10] sm:$0xff]
    %v43 = vld [vmem:[%s4 + $0x18] sm:$0xff]
    %s44 = scalar_lea.vmem %s4, 32
    %v45 = vld [vmem:[%s44] sm:$0xff]
    %v46 = vld [vmem:[%s44 + $0x8] sm:$0xff]
    %v47 = vld [vmem:[%s44 + $0x10] sm:$0xff]
    %v48 = vld [vmem:[%s44 + $0x18] sm:$0xff]
    %s49 = scalar_lea.vmem %s4, 64
    %v50 = vld [vmem:[%s49] sm:$0xff]
    %v51 = vld [vmem:[%s49 + $0x8] sm:$0xff]
    %v52 = vld [vmem:[%s49 + $0x10] sm:$0xff]
    %v53 = vld [vmem:[%s49 + $0x18] sm:$0xff]
    %s54 = scalar_lea.vmem %s4, 96
    %v55 = vld [vmem:[%s54] sm:$0xff]
    %v56 = vld [vmem:[%s54 + $0x8] sm:$0xff]
    %v57 = vld [vmem:[%s54 + $0x10] sm:$0xff]
    %v58 = vld [vmem:[%s54 + $0x18] sm:$0xff]
    %s59 = scalar_lea.vmem %s4, 128
    %v60 = vld [vmem:[%s59] sm:$0xff]
    %v61 = vld [vmem:[%s59 + $0x8] sm:$0xff]
    %v62 = vld [vmem:[%s59 + $0x10] sm:$0xff]
    %v63 = vld [vmem:[%s59 + $0x18] sm:$0xff]
    %s64 = scalar_lea.vmem %s4, 160
    %v65 = vld [vmem:[%s64] sm:$0xff]
    %v66 = vld [vmem:[%s64 + $0x8] sm:$0xff]
    %v67 = vld [vmem:[%s64 + $0x10] sm:$0xff]
    %v68 = vld [vmem:[%s64 + $0x18] sm:$0xff]
    %s69 = scalar_lea.vmem %s4, 192
    %v70 = vld [vmem:[%s69] sm:$0xff]
    %v71 = vld [vmem:[%s69 + $0x8] sm:$0xff]
    %v72 = vld [vmem:[%s69 + $0x10] sm:$0xff]
    %v73 = vld [vmem:[%s69 + $0x18] sm:$0xff]
    %s74 = scalar_lea.vmem %s4, 224
    %v75 = vld [vmem:[%s74] sm:$0xff]
    %v76 = vld [vmem:[%s74 + $0x8] sm:$0xff]
    %v77 = vld [vmem:[%s74 + $0x10] sm:$0xff]
    %v78 = vld [vmem:[%s74 + $0x18] sm:$0xff]
    %s79 = scalar_lea.vmem %s4, 256
    %v80 = vld [vmem:[%s79] sm:$0xff]
    %v81 = vld [vmem:[%s79 + $0x8] sm:$0xff]
    %v82 = vld [vmem:[%s79 + $0x10] sm:$0xff]
    %v83 = vld [vmem:[%s79 + $0x18] sm:$0xff]
    %v84 = vld [vmem:[%s5] sm:$0xff]
    %v85 = vld [vmem:[%s5 + $0x8] sm:$0xff]
    %v86 = vld [vmem:[%s5 + $0x10] sm:$0xff]
    %v87 = vld [vmem:[%s5 + $0x18] sm:$0xff]
    %v88 = vld [vmem:[%s6] sm:$0xf]
    %v89 = vld [vmem:[%s7] sm:$0xff]
    %v90 = vld [vmem:[%s1] sm:$0xff]
    %92 = vset.pattern.permute.xlu0 0
    %93 = vperm.xlu0 %92, %v36
    %v94 = vpop.permute.xlu0 %93
    %97 = vset.pattern.permute.xlu0 0
    %98 = vperm.xlu0 %97, %v37
    %v99 = vpop.permute.xlu0 %98
    %102 = vset.pattern.permute.xlu0 0
    %103 = vperm.xlu0 %102, %v38
    %v104 = vpop.permute.xlu0 %103
    %107 = vset.pattern.permute.xlu0 0
    %108 = vperm.xlu0 %107, %v39
    %v109 = vpop.permute.xlu0 %108
    %v115 = vunpack.c.l.b16 %v32
    %v116 = vunpack.c.l.b16 %v33
    %v117 = vunpack.c.l.b16 %v34
    %v118 = vunpack.c.l.b16 %v35
    %v119 = vpack.c.b16 %v116, %v115
    %v120 = vpack.c.b16 %v118, %v117
    %v122 = vunpack.c.l.b16 %v90
    %v123 = vunpack.c.h.b16 %v90
    %v124 = vpack.c.b16 %v122, %v122
    %v125 = vpack.c.b16 %v123, %v123
    %vm126 = vcmask 64512
    %v128 = vsel %vm126, %v119, 0
    %v131 = vsel %vm126, %v120, 0
    %vm133 = vcmask 1043456
    %v135 = vsel %vm133, %v124, 0
    %v138 = vsel %vm133, %v125, 0
    %140 = vmatprep.subr.bf16.mxu0 %v138
    %141 = vmatpush1.bf16.msra.mxu0 %v135
    %142 = vmatprep.subr.bf16.mxu0 0
    %143 = vmatpush1.bf16.msra.mxu0 0
    %144 = vmatprep.subr.bf16.mxu0 0
    %145 = vmatpush1.bf16.msra.mxu0 0
    %146 = vmatprep.subr.bf16.mxu0 0
    %147 = vmatpush1.bf16.msra.mxu0 0
    %148 = vmatprep.subr.bf16.mxu0 0
    %149 = vmatpush1.bf16.msra.mxu0 0
    %150 = vmatprep.subr.bf16.mxu0 0
    %151 = vmatpush1.bf16.msra.mxu0 0
    %152 = vmatprep.subr.bf16.mxu0 0
    %153 = vmatpush1.bf16.msra.mxu0 0
    %154 = vmatprep.subr.bf16.mxu0 0
    %155 = vmatpush1.bf16.msra.mxu0 0
    %156 = vmatprep.subr.bf16.mxu0 0
    %157 = vmatpush1.bf16.msra.mxu0 0
    %158 = vmatprep.subr.bf16.mxu0 0
    %159 = vmatpush1.bf16.msra.mxu0 0
    %160 = vmatprep.subr.bf16.mxu0 0
    %161 = vmatpush1.bf16.msra.mxu0 0
    %162 = vmatprep.subr.bf16.mxu0 0
    %163 = vmatpush1.bf16.msra.mxu0 0
    %164 = vmatprep.subr.bf16.mxu0 0
    %165 = vmatpush1.bf16.msra.mxu0 0
    %166 = vmatprep.subr.bf16.mxu0 0
    %167 = vmatpush1.bf16.msra.mxu0 0
    %168 = vmatprep.subr.bf16.mxu0 0
    %169 = vmatpush1.bf16.msra.mxu0 0
    %170 = vmatprep.subr.bf16.mxu0 0
    %171 = vmatpush1.bf16.msra.mxu0 0
    %172 = vmatprep.mubr.bf16.mxu0 0
    %173 = vmatmul.mubr.bf16.gmra.mrb[0].mxu0 %v128
    %v174 = vpop.f32.mrb[0].mxu0
    %v175 = vadd.f32 %v94, %v174
    %v176 = vpop.f32.mrb[0].mxu0
    %v177 = vadd.f32 %v94, %v176
    %v178 = vpop.f32.mrb[0].mxu0
    %v179 = vadd.f32 %v99, %v178
    %v180 = vpop.f32.mrb[0].mxu0
    %v181 = vadd.f32 %v99, %v180
    %182 = vmatprep.mubr.bf16.mxu0 0
    %183 = vmatmul.mubr.bf16.gmra.mrb[0].mxu0 %v131
    %v184 = vpop.f32.mrb[0].mxu0
    %v185 = vadd.f32 %v104, %v184
    %v186 = vpop.f32.mrb[0].mxu0
    %v187 = vadd.f32 %v104, %v186
    %v188 = vpop.f32.mrb[0].mxu0
    %v189 = vadd.f32 %v109, %v188
    %v190 = vpop.f32.mrb[0].mxu0
    %v191 = vadd.f32 %v109, %v190
    %192 = vdwg.mxu0
    %193 = vrot.lane.b32.xlu0 %v175, 1
    %v194 = vpop.permute.xlu0 %193
    %195 = vrot.lane.b32.xlu0 %v179, 1
    %v196 = vpop.permute.xlu0 %195
    %197 = vrot.lane.b32.xlu0 %v185, 1
    %v198 = vpop.permute.xlu0 %197
    %199 = vrot.lane.b32.xlu0 %v189, 1
    %v200 = vpop.permute.xlu0 %199
    %201 = vrot.lane.b32.xlu0 %v177, 1
    %v202 = vpop.permute.xlu0 %201
    %203 = vrot.lane.b32.xlu0 %v181, 1
    %v204 = vpop.permute.xlu0 %203
    %205 = vrot.lane.b32.xlu0 %v187, 1
    %v206 = vpop.permute.xlu0 %205
    %207 = vrot.lane.b32.xlu0 %v191, 1
    %v208 = vpop.permute.xlu0 %207
    %v209 = vlaneseq
    %v210 = vand.u32 %v209, 127
    %vm211 = vcmp.lt.s32.totalorder %v210, 1
    %v212 = vsel %vm211, %v194, %v202
    %v213 = vsel %vm211, %v196, %v204
    %v214 = vsel %vm211, %v198, %v206
    %v215 = vsel %vm211, %v200, %v208
    %v216 = vsel %vm211, %v202, %v194
    %v217 = vsel %vm211, %v204, %v196
    %v218 = vsel %vm211, %v206, %v198
    %v219 = vsel %vm211, %v208, %v200
    %v221 = vlaneseq
    %v222 = vshrl.u32 %v221, 7
    %v223 = vsub.s32 0, %v222
    %v224 = vrot.slane %v31, %v223
    %v225 = vlaneseq
    %v226 = vshrl.u32 %v225, 7
    %v227 = vsub.s32 4, %v226
    %v228 = vrot.slane %v31, %v227
    %v231 = vlaneseq
    %v232 = vshrl.u32 %v231, 7
    %v233 = vsub.s32 0, %v232
    %v234 = vrot.slane %v224, %v233
    %v235 = vlaneseq
    %v236 = vshrl.u32 %v235, 7
    %v237 = vsub.s32 0, %v236
    %v238 = vrot.slane %v228, %v237
    %v239 = vmul.f32 %v216, %v234
    %v240 = vmul.f32 %v212, %v238
    %v241 = vmul.f32 %v217, %v234
    %v242 = vmul.f32 %v213, %v238
    %v243 = vmul.f32 %v218, %v234
    %v244 = vmul.f32 %v214, %v238
    %v245 = vmul.f32 %v219, %v234
    %v246 = vmul.f32 %v215, %v238
    %247 = vrot.lane.b32.xlu0 %v175, 127
    %v248 = vpop.permute.xlu0 %247
    %249 = vrot.lane.b32.xlu0 %v179, 127
    %v250 = vpop.permute.xlu0 %249
    %251 = vrot.lane.b32.xlu0 %v185, 127
    %v252 = vpop.permute.xlu0 %251
    %253 = vrot.lane.b32.xlu0 %v189, 127
    %v254 = vpop.permute.xlu0 %253
    %255 = vrot.lane.b32.xlu0 %v177, 127
    %v256 = vpop.permute.xlu0 %255
    %257 = vrot.lane.b32.xlu0 %v181, 127
    %v258 = vpop.permute.xlu0 %257
    %259 = vrot.lane.b32.xlu0 %v187, 127
    %v260 = vpop.permute.xlu0 %259
    %261 = vrot.lane.b32.xlu0 %v191, 127
    %v262 = vpop.permute.xlu0 %261
    %vm263 = vcmp.lt.s32.totalorder %v210, 127
    %v264 = vsel %vm263, %v248, %v256
    %v265 = vsel %vm263, %v250, %v258
    %v266 = vsel %vm263, %v252, %v260
    %v267 = vsel %vm263, %v254, %v262
    %v268 = vsel %vm263, %v256, %v248
    %v269 = vsel %vm263, %v258, %v250
    %v270 = vsel %vm263, %v260, %v252
    %v271 = vsel %vm263, %v262, %v254
    %v272 = vlaneseq
    %v273 = vshrl.u32 %v272, 7
    %v274 = vsub.s32 1, %v273
    %v275 = vrot.slane %v31, %v274
    %v276 = vlaneseq
    %v277 = vshrl.u32 %v276, 7
    %v278 = vsub.s32 5, %v277
    %v279 = vrot.slane %v31, %v278
    %v282 = vlaneseq
    %v283 = vshrl.u32 %v282, 7
    %v284 = vsub.s32 1, %v283
    %v285 = vrot.slane %v275, %v284
    %v286 = vlaneseq
    %v287 = vshrl.u32 %v286, 7
    %v288 = vsub.s32 1, %v287
    %v289 = vrot.slane %v279, %v288
    %v290 = vmul.f32 %v264, %v285
    %v291 = vmul.f32 %v268, %v289
    %v292 = vmul.f32 %v265, %v285
    %v293 = vmul.f32 %v269, %v289
    %v294 = vmul.f32 %v266, %v285
    %v295 = vmul.f32 %v270, %v289
    %v296 = vmul.f32 %v267, %v285
    %v297 = vmul.f32 %v271, %v289
    %299 = vset.pattern.permute.xlu0 0
    %300 = vperm.xlu0 %299, %v55
    %v301 = vpop.permute.xlu0 %300
    %304 = vset.pattern.permute.xlu0 0
    %305 = vperm.xlu0 %304, %v56
    %v306 = vpop.permute.xlu0 %305
    %309 = vset.pattern.permute.xlu0 0
    %310 = vperm.xlu0 %309, %v57
    %v311 = vpop.permute.xlu0 %310
    %314 = vset.pattern.permute.xlu0 0
    %315 = vperm.xlu0 %314, %v58
    %v316 = vpop.permute.xlu0 %315
    %v318 = vmul.f32 %v301, %v239
    %v319 = vmul.f32 %v301, %v240
    %v320 = vmul.f32 %v306, %v241
    %v321 = vmul.f32 %v306, %v242
    %v322 = vmul.f32 %v311, %v243
    %v323 = vmul.f32 %v311, %v244
    %v324 = vmul.f32 %v316, %v245
    %v325 = vmul.f32 %v316, %v246
    %327 = vset.pattern.permute.xlu0 0
    %328 = vperm.xlu0 %327, %v60
    %v329 = vpop.permute.xlu0 %328
    %332 = vset.pattern.permute.xlu0 0
    %333 = vperm.xlu0 %332, %v61
    %v334 = vpop.permute.xlu0 %333
    %337 = vset.pattern.permute.xlu0 0
    %338 = vperm.xlu0 %337, %v62
    %v339 = vpop.permute.xlu0 %338
    %342 = vset.pattern.permute.xlu0 0
    %343 = vperm.xlu0 %342, %v63
    %v344 = vpop.permute.xlu0 %343
    %v346 = vmul.f32 %v329, %v175
    %v347 = vmul.f32 %v329, %v177
    %v348 = vmul.f32 %v334, %v179
    %v349 = vmul.f32 %v334, %v181
    %v350 = vmul.f32 %v339, %v185
    %v351 = vmul.f32 %v339, %v187
    %v352 = vmul.f32 %v344, %v189
    %v353 = vmul.f32 %v344, %v191
    %v354 = vadd.f32 %v318, %v346
    %v355 = vadd.f32 %v319, %v347
    %v356 = vadd.f32 %v320, %v348
    %v357 = vadd.f32 %v321, %v349
    %v358 = vadd.f32 %v322, %v350
    %v359 = vadd.f32 %v323, %v351
    %v360 = vadd.f32 %v324, %v352
    %v361 = vadd.f32 %v325, %v353
    %363 = vset.pattern.permute.xlu0 0
    %364 = vperm.xlu0 %363, %v65
    %v365 = vpop.permute.xlu0 %364
    %368 = vset.pattern.permute.xlu0 0
    %369 = vperm.xlu0 %368, %v66
    %v370 = vpop.permute.xlu0 %369
    %373 = vset.pattern.permute.xlu0 0
    %374 = vperm.xlu0 %373, %v67
    %v375 = vpop.permute.xlu0 %374
    %378 = vset.pattern.permute.xlu0 0
    %379 = vperm.xlu0 %378, %v68
    %v380 = vpop.permute.xlu0 %379
    %v382 = vmul.f32 %v365, %v290
    %v383 = vmul.f32 %v365, %v291
    %v384 = vmul.f32 %v370, %v292
    %v385 = vmul.f32 %v370, %v293
    %v386 = vmul.f32 %v375, %v294
    %v387 = vmul.f32 %v375, %v295
    %v388 = vmul.f32 %v380, %v296
    %v389 = vmul.f32 %v380, %v297
    %v390 = vadd.f32 %v354, %v382
    %v391 = vadd.f32 %v355, %v383
    %v392 = vadd.f32 %v356, %v384
    %v393 = vadd.f32 %v357, %v385
    %v394 = vadd.f32 %v358, %v386
    %v395 = vadd.f32 %v359, %v387
    %v396 = vadd.f32 %v360, %v388
    %v397 = vadd.f32 %v361, %v389
    %399 = vset.pattern.permute.xlu0 0
    %400 = vperm.xlu0 %399, %v84
    %v401 = vpop.permute.xlu0 %400
    %404 = vset.pattern.permute.xlu0 0
    %405 = vperm.xlu0 %404, %v85
    %v406 = vpop.permute.xlu0 %405
    %409 = vset.pattern.permute.xlu0 0
    %410 = vperm.xlu0 %409, %v86
    %v411 = vpop.permute.xlu0 %410
    %414 = vset.pattern.permute.xlu0 0
    %415 = vperm.xlu0 %414, %v87
    %v416 = vpop.permute.xlu0 %415
    %v418 = vadd.f32 %v390, %v401
    %v419 = vadd.f32 %v391, %v401
    %v420 = vadd.f32 %v392, %v406
    %v421 = vadd.f32 %v393, %v406
    %v422 = vadd.f32 %v394, %v411
    %v423 = vadd.f32 %v395, %v411
    %v424 = vadd.f32 %v396, %v416
    %v425 = vadd.f32 %v397, %v416
    %427 = vset.pattern.permute.xlu0 0
    %428 = vperm.xlu0 %427, %v40
    %v429 = vpop.permute.xlu0 %428
    %432 = vset.pattern.permute.xlu0 0
    %433 = vperm.xlu0 %432, %v41
    %v434 = vpop.permute.xlu0 %433
    %437 = vset.pattern.permute.xlu0 0
    %438 = vperm.xlu0 %437, %v42
    %v439 = vpop.permute.xlu0 %438
    %442 = vset.pattern.permute.xlu0 0
    %443 = vperm.xlu0 %442, %v43
    %v444 = vpop.permute.xlu0 %443
    %v446 = vmul.f32 %v429, %v239
    %v447 = vmul.f32 %v429, %v240
    %v448 = vmul.f32 %v434, %v241
    %v449 = vmul.f32 %v434, %v242
    %v450 = vmul.f32 %v439, %v243
    %v451 = vmul.f32 %v439, %v244
    %v452 = vmul.f32 %v444, %v245
    %v453 = vmul.f32 %v444, %v246
    %455 = vset.pattern.permute.xlu0 0
    %456 = vperm.xlu0 %455, %v45
    %v457 = vpop.permute.xlu0 %456
    %460 = vset.pattern.permute.xlu0 0
    %461 = vperm.xlu0 %460, %v46
    %v462 = vpop.permute.xlu0 %461
    %465 = vset.pattern.permute.xlu0 0
    %466 = vperm.xlu0 %465, %v47
    %v467 = vpop.permute.xlu0 %466
    %470 = vset.pattern.permute.xlu0 0
    %471 = vperm.xlu0 %470, %v48
    %v472 = vpop.permute.xlu0 %471
    %v474 = vmul.f32 %v457, %v175
    %v475 = vmul.f32 %v457, %v177
    %v476 = vmul.f32 %v462, %v179
    %v477 = vmul.f32 %v462, %v181
    %v478 = vmul.f32 %v467, %v185
    %v479 = vmul.f32 %v467, %v187
    %v480 = vmul.f32 %v472, %v189
    %v481 = vmul.f32 %v472, %v191
    %v482 = vadd.f32 %v446, %v474
    %v483 = vadd.f32 %v447, %v475
    %v484 = vadd.f32 %v448, %v476
    %v485 = vadd.f32 %v449, %v477
    %v486 = vadd.f32 %v450, %v478
    %v487 = vadd.f32 %v451, %v479
    %v488 = vadd.f32 %v452, %v480
    %v489 = vadd.f32 %v453, %v481
    %491 = vset.pattern.permute.xlu0 0
    %492 = vperm.xlu0 %491, %v50
    %v493 = vpop.permute.xlu0 %492
    %496 = vset.pattern.permute.xlu0 0
    %497 = vperm.xlu0 %496, %v51
    %v498 = vpop.permute.xlu0 %497
    %501 = vset.pattern.permute.xlu0 0
    %502 = vperm.xlu0 %501, %v52
    %v503 = vpop.permute.xlu0 %502
    %506 = vset.pattern.permute.xlu0 0
    %507 = vperm.xlu0 %506, %v53
    %v508 = vpop.permute.xlu0 %507
    %v510 = vmul.f32 %v493, %v290
    %v511 = vmul.f32 %v493, %v291
    %v512 = vmul.f32 %v498, %v292
    %v513 = vmul.f32 %v498, %v293
    %v514 = vmul.f32 %v503, %v294
    %v515 = vmul.f32 %v503, %v295
    %v516 = vmul.f32 %v508, %v296
    %v517 = vmul.f32 %v508, %v297
    %v518 = vadd.f32 %v482, %v510
    %v519 = vadd.f32 %v483, %v511
    %v520 = vadd.f32 %v484, %v512
    %v521 = vadd.f32 %v485, %v513
    %v522 = vadd.f32 %v486, %v514
    %v523 = vadd.f32 %v487, %v515
    %v524 = vadd.f32 %v488, %v516
    %v525 = vadd.f32 %v489, %v517
    %526 = vrot.lane.b32.xlu0 %v518, 16
    %v527 = vpop.permute.xlu0 %526
    %528 = vrot.lane.b32.xlu0 %v520, 16
    %v529 = vpop.permute.xlu0 %528
    %530 = vrot.lane.b32.xlu0 %v522, 16
    %v531 = vpop.permute.xlu0 %530
    %532 = vrot.lane.b32.xlu0 %v524, 16
    %v533 = vpop.permute.xlu0 %532
    %534 = vrot.lane.b32.xlu0 %v519, 16
    %v535 = vpop.permute.xlu0 %534
    %536 = vrot.lane.b32.xlu0 %v521, 16
    %v537 = vpop.permute.xlu0 %536
    %538 = vrot.lane.b32.xlu0 %v523, 16
    %v539 = vpop.permute.xlu0 %538
    %540 = vrot.lane.b32.xlu0 %v525, 16
    %v541 = vpop.permute.xlu0 %540
    %vm542 = vcmp.lt.s32.totalorder %v210, 16
    %v543 = vsel %vm542, %v527, %v535
    %v544 = vsel %vm542, %v529, %v537
    %v545 = vsel %vm542, %v531, %v539
    %v546 = vsel %vm542, %v533, %v541
    %v547 = vsel %vm542, %v535, %v527
    %v548 = vsel %vm542, %v537, %v529
    %v549 = vsel %vm542, %v539, %v531
    %v550 = vsel %vm542, %v541, %v533
    %v551 = vlaneseq
    %v552 = vshrl.u32 %v551, 7
    %v553 = vsub.s32 2, %v552
    %v554 = vrot.slane %v31, %v553
    %v555 = vlaneseq
    %v556 = vshrl.u32 %v555, 7
    %v557 = vsub.s32 6, %v556
    %v558 = vrot.slane %v31, %v557
    %v561 = vlaneseq
    %v562 = vshrl.u32 %v561, 7
    %v563 = vsub.s32 2, %v562
    %v564 = vrot.slane %v554, %v563
    %v565 = vlaneseq
    %v566 = vshrl.u32 %v565, 7
    %v567 = vsub.s32 2, %v566
    %v568 = vrot.slane %v558, %v567
    %v569 = vmul.f32 %v547, %v564
    %v570 = vmul.f32 %v543, %v568
    %v571 = vmul.f32 %v548, %v564
    %v572 = vmul.f32 %v544, %v568
    %v573 = vmul.f32 %v549, %v564
    %v574 = vmul.f32 %v545, %v568
    %v575 = vmul.f32 %v550, %v564
    %v576 = vmul.f32 %v546, %v568
    %v577 = vadd.f32 %v418, %v569
    %v578 = vadd.f32 %v419, %v570
    %v579 = vadd.f32 %v420, %v571
    %v580 = vadd.f32 %v421, %v572
    %v581 = vadd.f32 %v422, %v573
    %v582 = vadd.f32 %v423, %v574
    %v583 = vadd.f32 %v424, %v575
    %v584 = vadd.f32 %v425, %v576
    %586 = vset.pattern.permute.xlu0 0
    %587 = vperm.xlu0 %586, %v70
    %v588 = vpop.permute.xlu0 %587
    %591 = vset.pattern.permute.xlu0 0
    %592 = vperm.xlu0 %591, %v71
    %v593 = vpop.permute.xlu0 %592
    %596 = vset.pattern.permute.xlu0 0
    %597 = vperm.xlu0 %596, %v72
    %v598 = vpop.permute.xlu0 %597
    %601 = vset.pattern.permute.xlu0 0
    %602 = vperm.xlu0 %601, %v73
    %v603 = vpop.permute.xlu0 %602
    %v605 = vmul.f32 %v588, %v239
    %v606 = vmul.f32 %v588, %v240
    %v607 = vmul.f32 %v593, %v241
    %v608 = vmul.f32 %v593, %v242
    %v609 = vmul.f32 %v598, %v243
    %v610 = vmul.f32 %v598, %v244
    %v611 = vmul.f32 %v603, %v245
    %v612 = vmul.f32 %v603, %v246
    %614 = vset.pattern.permute.xlu0 0
    %615 = vperm.xlu0 %614, %v75
    %v616 = vpop.permute.xlu0 %615
    %619 = vset.pattern.permute.xlu0 0
    %620 = vperm.xlu0 %619, %v76
    %v621 = vpop.permute.xlu0 %620
    %624 = vset.pattern.permute.xlu0 0
    %625 = vperm.xlu0 %624, %v77
    %v626 = vpop.permute.xlu0 %625
    %629 = vset.pattern.permute.xlu0 0
    %630 = vperm.xlu0 %629, %v78
    %v631 = vpop.permute.xlu0 %630
    %v633 = vmul.f32 %v616, %v175
    %v634 = vmul.f32 %v616, %v177
    %v635 = vmul.f32 %v621, %v179
    %v636 = vmul.f32 %v621, %v181
    %v637 = vmul.f32 %v626, %v185
    %v638 = vmul.f32 %v626, %v187
    %v639 = vmul.f32 %v631, %v189
    %v640 = vmul.f32 %v631, %v191
    %v641 = vadd.f32 %v605, %v633
    %v642 = vadd.f32 %v606, %v634
    %v643 = vadd.f32 %v607, %v635
    %v644 = vadd.f32 %v608, %v636
    %v645 = vadd.f32 %v609, %v637
    %v646 = vadd.f32 %v610, %v638
    %v647 = vadd.f32 %v611, %v639
    %v648 = vadd.f32 %v612, %v640
    %650 = vset.pattern.permute.xlu0 0
    %651 = vperm.xlu0 %650, %v80
    %v652 = vpop.permute.xlu0 %651
    %655 = vset.pattern.permute.xlu0 0
    %656 = vperm.xlu0 %655, %v81
    %v657 = vpop.permute.xlu0 %656
    %660 = vset.pattern.permute.xlu0 0
    %661 = vperm.xlu0 %660, %v82
    %v662 = vpop.permute.xlu0 %661
    %665 = vset.pattern.permute.xlu0 0
    %666 = vperm.xlu0 %665, %v83
    %v667 = vpop.permute.xlu0 %666
    %v669 = vmul.f32 %v652, %v290
    %v670 = vmul.f32 %v652, %v291
    %v671 = vmul.f32 %v657, %v292
    %v672 = vmul.f32 %v657, %v293
    %v673 = vmul.f32 %v662, %v294
    %v674 = vmul.f32 %v662, %v295
    %v675 = vmul.f32 %v667, %v296
    %v676 = vmul.f32 %v667, %v297
    %v677 = vadd.f32 %v641, %v669
    %v678 = vadd.f32 %v642, %v670
    %v679 = vadd.f32 %v643, %v671
    %v680 = vadd.f32 %v644, %v672
    %v681 = vadd.f32 %v645, %v673
    %v682 = vadd.f32 %v646, %v674
    %v683 = vadd.f32 %v647, %v675
    %v684 = vadd.f32 %v648, %v676
    %685 = vrot.lane.b32.xlu0 %v677, 112
    %v686 = vpop.permute.xlu0 %685
    %687 = vrot.lane.b32.xlu0 %v679, 112
    %v688 = vpop.permute.xlu0 %687
    %689 = vrot.lane.b32.xlu0 %v681, 112
    %v690 = vpop.permute.xlu0 %689
    %691 = vrot.lane.b32.xlu0 %v683, 112
    %v692 = vpop.permute.xlu0 %691
    %693 = vrot.lane.b32.xlu0 %v678, 112
    %v694 = vpop.permute.xlu0 %693
    %695 = vrot.lane.b32.xlu0 %v680, 112
    %v696 = vpop.permute.xlu0 %695
    %697 = vrot.lane.b32.xlu0 %v682, 112
    %v698 = vpop.permute.xlu0 %697
    %699 = vrot.lane.b32.xlu0 %v684, 112
    %v700 = vpop.permute.xlu0 %699
    %vm701 = vcmp.lt.s32.totalorder %v210, 112
    %v702 = vsel %vm701, %v686, %v694
    %v703 = vsel %vm701, %v688, %v696
    %v704 = vsel %vm701, %v690, %v698
    %v705 = vsel %vm701, %v692, %v700
    %v706 = vsel %vm701, %v694, %v686
    %v707 = vsel %vm701, %v696, %v688
    %v708 = vsel %vm701, %v698, %v690
    %v709 = vsel %vm701, %v700, %v692
    %v710 = vlaneseq
    %v711 = vshrl.u32 %v710, 7
    %v712 = vsub.s32 3, %v711
    %v713 = vrot.slane %v31, %v712
    %v714 = vlaneseq
    %v715 = vshrl.u32 %v714, 7
    %v716 = vsub.s32 7, %v715
    %v717 = vrot.slane %v31, %v716
    %v720 = vlaneseq
    %v721 = vshrl.u32 %v720, 7
    %v722 = vsub.s32 3, %v721
    %v723 = vrot.slane %v713, %v722
    %v724 = vlaneseq
    %v725 = vshrl.u32 %v724, 7
    %v726 = vsub.s32 3, %v725
    %v727 = vrot.slane %v717, %v726
    %v728 = vmul.f32 %v702, %v723
    %v729 = vmul.f32 %v706, %v727
    %v730 = vmul.f32 %v703, %v723
    %v731 = vmul.f32 %v707, %v727
    %v732 = vmul.f32 %v704, %v723
    %v733 = vmul.f32 %v708, %v727
    %v734 = vmul.f32 %v705, %v723
    %v735 = vmul.f32 %v709, %v727
    %v736 = vadd.f32 %v577, %v728
    %v737 = vadd.f32 %v578, %v729
    %v738 = vadd.f32 %v579, %v730
    %v739 = vadd.f32 %v580, %v731
    %v740 = vadd.f32 %v581, %v732
    %v741 = vadd.f32 %v582, %v733
    %v742 = vadd.f32 %v583, %v734
    %v743 = vadd.f32 %v584, %v735
    %v744 = vmul.f32 %v736, %v736
    %v745 = vmul.f32 %v737, %v737
    %v746 = vmul.f32 %v738, %v738
    %v747 = vmul.f32 %v739, %v739
    %v748 = vmul.f32 %v736, %v744
    %v749 = vmul.f32 %v737, %v745
    %v750 = vmul.f32 %v738, %v746
    %v751 = vmul.f32 %v739, %v747
    %v752 = vmul.f32 %v748, 0.044715
    %v753 = vmul.f32 %v749, 0.044715
    %v754 = vmul.f32 %v750, 0.044715
    %v755 = vmul.f32 %v751, 0.044715
    %v756 = vadd.f32 %v736, %v752
    %v757 = vadd.f32 %v737, %v753
    %v758 = vadd.f32 %v738, %v754
    %v759 = vadd.f32 %v739, %v755
    %v760 = vmul.f32 %v756, 0.7978846
    %v761 = vmul.f32 %v757, 0.7978846
    %v762 = vmul.f32 %v758, 0.7978846
    %v763 = vmul.f32 %v759, 0.7978846
    %v764 = vtanh.pop %v760
    %v765 = vtanh.pop %v761
    %v766 = vtanh.pop %v762
    %v767 = vtanh.pop %v763
    %v768 = vadd.f32 %v764, 1.0
    %v769 = vadd.f32 %v765, 1.0
    %v770 = vadd.f32 %v766, 1.0
    %v771 = vadd.f32 %v767, 1.0
    %v772 = vmul.f32 %v768, 0.5
    %v773 = vmul.f32 %v769, 0.5
    %v774 = vmul.f32 %v770, 0.5
    %v775 = vmul.f32 %v771, 0.5
    %v776 = vmul.f32 %v736, %v772
    %v777 = vmul.f32 %v737, %v773
    %v778 = vmul.f32 %v738, %v774
    %v779 = vmul.f32 %v739, %v775
    %v780 = vmul.f32 %v776, %v740
    %v781 = vmul.f32 %v777, %v741
    %v782 = vmul.f32 %v778, %v742
    %v783 = vmul.f32 %v779, %v743
    %v784 = vpack.c.bf16 %v782, %v780
    %v785 = vpack.c.bf16 %v783, %v781
    %787 = vset.pattern.permute.xlu0 0
    %788 = vperm.xlu0 %787, %v89
    %v789 = vpop.permute.xlu0 %788
    %vm791 = vcmask 130048
    %v793 = vsel %vm791, %v88, 0
    %795 = vmatprep.subr.bf16.mxu0 %v785
    %796 = vmatpush1.bf16.msra.mxu0 %v784
    %797 = vmatprep.subr.bf16.mxu0 0
    %798 = vmatpush1.bf16.msra.mxu0 0
    %799 = vmatprep.subr.bf16.mxu0 0
    %800 = vmatpush1.bf16.msra.mxu0 0
    %801 = vmatprep.subr.bf16.mxu0 0
    %802 = vmatpush1.bf16.msra.mxu0 0
    %803 = vmatprep.subr.bf16.mxu0 0
    %804 = vmatpush1.bf16.msra.mxu0 0
    %805 = vmatprep.subr.bf16.mxu0 0
    %806 = vmatpush1.bf16.msra.mxu0 0
    %807 = vmatprep.subr.bf16.mxu0 0
    %808 = vmatpush1.bf16.msra.mxu0 0
    %809 = vmatprep.subr.bf16.mxu0 0
    %810 = vmatpush1.bf16.msra.mxu0 0
    %811 = vmatprep.subr.bf16.mxu0 0
    %812 = vmatpush1.bf16.msra.mxu0 0
    %813 = vmatprep.subr.bf16.mxu0 0
    %814 = vmatpush1.bf16.msra.mxu0 0
    %815 = vmatprep.subr.bf16.mxu0 0
    %816 = vmatpush1.bf16.msra.mxu0 0
    %817 = vmatprep.subr.bf16.mxu0 0
    %818 = vmatpush1.bf16.msra.mxu0 0
    %819 = vmatprep.subr.bf16.mxu0 0
    %820 = vmatpush1.bf16.msra.mxu0 0
    %821 = vmatprep.subr.bf16.mxu0 0
    %822 = vmatpush1.bf16.msra.mxu0 0
    %823 = vmatprep.subr.bf16.mxu0 0
    %824 = vmatpush1.bf16.msra.mxu0 0
    %825 = vmatprep.subr.bf16.mxu0 0
    %826 = vmatpush1.bf16.msra.mxu0 0
    %827 = vmatprep.mubr.bf16.mxu0 0
    %828 = vmatmul.mubr.bf16.gmra.mrb[0].mxu0 %v793
    %v829 = vpop.f32.mrb[0].mxu0
    %v830 = vadd.f32 %v789, %v829
    %v831 = vpop.f32.mrb[0].mxu0
    %v832 = vadd.f32 %v789, %v831
    %v833 = vpop.f32.mrb[0].mxu0
    %v834 = vpop.f32.mrb[0].mxu0
    %835 = vdwg.mxu0
    %v836 = vpack.c.bf16 %v830, %v830
    %v837 = vpack.c.bf16 %v832, %v832
    %v840 = vunpack.c.l.b16 %v836
    %v841 = vunpack.c.l.b16 %v837
    %v842 = vpack.c.b16 %v841, %v840
    %844 = vst [vmem:[#allocation2] sm:$0xff] %v842
    %s845 = scalar_lea.vmem %s1, 8
    %v846 = vld [vmem:[%s845] sm:$0xff]
    %v848 = vunpack.c.l.b16 %v846
    %v849 = vunpack.c.h.b16 %v846
    %v850 = vpack.c.b16 %v848, %v848
    %v851 = vpack.c.b16 %v849, %v849
    %v853 = vsel %vm133, %v850, 0
    %v856 = vsel %vm133, %v851, 0
    %858 = vmatprep.subr.bf16.mxu0 %v856
    %859 = vmatpush1.bf16.msra.mxu0 %v853
    %860 = vmatprep.subr.bf16.mxu0 0
    %861 = vmatpush1.bf16.msra.mxu0 0
    %862 = vmatprep.subr.bf16.mxu0 0
    %863 = vmatpush1.bf16.msra.mxu0 0
    %864 = vmatprep.subr.bf16.mxu0 0
    %865 = vmatpush1.bf16.msra.mxu0 0
    %866 = vmatprep.subr.bf16.mxu0 0
    %867 = vmatpush1.bf16.msra.mxu0 0
    %868 = vmatprep.subr.bf16.mxu0 0
    %869 = vmatpush1.bf16.msra.mxu0 0
    %870 = vmatprep.subr.bf16.mxu0 0
    %871 = vmatpush1.bf16.msra.mxu0 0
    %872 = vmatprep.subr.bf16.mxu0 0
    %873 = vmatpush1.bf16.msra.mxu0 0
    %874 = vmatprep.subr.bf16.mxu0 0
    %875 = vmatpush1.bf16.msra.mxu0 0
    %876 = vmatprep.subr.bf16.mxu0 0
    %877 = vmatpush1.bf16.msra.mxu0 0
    %878 = vmatprep.subr.bf16.mxu0 0
    %879 = vmatpush1.bf16.msra.mxu0 0
    %880 = vmatprep.subr.bf16.mxu0 0
    %881 = vmatpush1.bf16.msra.mxu0 0
    %882 = vmatprep.subr.bf16.mxu0 0
    %883 = vmatpush1.bf16.msra.mxu0 0
    %884 = vmatprep.subr.bf16.mxu0 0
    %885 = vmatpush1.bf16.msra.mxu0 0
    %886 = vmatprep.subr.bf16.mxu0 0
    %887 = vmatpush1.bf16.msra.mxu0 0
    %888 = vmatprep.subr.bf16.mxu0 0
    %889 = vmatpush1.bf16.msra.mxu0 0
    %890 = vmatprep.mubr.bf16.mxu0 0
    %891 = vmatmul.mubr.bf16.gmra.mrb[0].mxu0 %v128
    %v892 = vpop.f32.mrb[0].mxu0
    %v893 = vadd.f32 %v94, %v892
    %v894 = vpop.f32.mrb[0].mxu0
    %v895 = vadd.f32 %v94, %v894
    %v896 = vpop.f32.mrb[0].mxu0
    %v897 = vadd.f32 %v99, %v896
    %v898 = vpop.f32.mrb[0].mxu0
    %v899 = vadd.f32 %v99, %v898
    %900 = vmatprep.mubr.bf16.mxu0 0
    %901 = vmatmul.mubr.bf16.gmra.mrb[0].mxu0 %v131
    %v902 = vpop.f32.mrb[0].mxu0
    %v903 = vadd.f32 %v104, %v902
    %v904 = vpop.f32.mrb[0].mxu0
    %v905 = vadd.f32 %v104, %v904
    %v906 = vpop.f32.mrb[0].mxu0
    %v907 = vadd.f32 %v109, %v906
    %v908 = vpop.f32.mrb[0].mxu0
    %v909 = vadd.f32 %v109, %v908
    %910 = vdwg.mxu0
    %911 = vrot.lane.b32.xlu0 %v893, 1
    %v912 = vpop.permute.xlu0 %911
    %913 = vrot.lane.b32.xlu0 %v897, 1
    %v914 = vpop.permute.xlu0 %913
    %915 = vrot.lane.b32.xlu0 %v903, 1
    %v916 = vpop.permute.xlu0 %915
    %917 = vrot.lane.b32.xlu0 %v907, 1
    %v918 = vpop.permute.xlu0 %917
    %919 = vrot.lane.b32.xlu0 %v895, 1
    %v920 = vpop.permute.xlu0 %919
    %921 = vrot.lane.b32.xlu0 %v899, 1
    %v922 = vpop.permute.xlu0 %921
    %923 = vrot.lane.b32.xlu0 %v905, 1
    %v924 = vpop.permute.xlu0 %923
    %925 = vrot.lane.b32.xlu0 %v909, 1
    %v926 = vpop.permute.xlu0 %925
    %v927 = vsel %vm211, %v912, %v920
    %v928 = vsel %vm211, %v914, %v922
    %v929 = vsel %vm211, %v916, %v924
    %v930 = vsel %vm211, %v918, %v926
    %v931 = vsel %vm211, %v920, %v912
    %v932 = vsel %vm211, %v922, %v914
    %v933 = vsel %vm211, %v924, %v916
    %v934 = vsel %vm211, %v926, %v918
    %v935 = vmul.f32 %v931, %v234
    %v936 = vmul.f32 %v927, %v238
    %v937 = vmul.f32 %v932, %v234
    %v938 = vmul.f32 %v928, %v238
    %v939 = vmul.f32 %v933, %v234
    %v940 = vmul.f32 %v929, %v238
    %v941 = vmul.f32 %v934, %v234
    %v942 = vmul.f32 %v930, %v238
    %943 = vrot.lane.b32.xlu0 %v893, 127
    %v944 = vpop.permute.xlu0 %943
    %945 = vrot.lane.b32.xlu0 %v897, 127
    %v946 = vpop.permute.xlu0 %945
    %947 = vrot.lane.b32.xlu0 %v903, 127
    %v948 = vpop.permute.xlu0 %947
    %949 = vrot.lane.b32.xlu0 %v907, 127
    %v950 = vpop.permute.xlu0 %949
    %951 = vrot.lane.b32.xlu0 %v895, 127
    %v952 = vpop.permute.xlu0 %951
    %953 = vrot.lane.b32.xlu0 %v899, 127
    %v954 = vpop.permute.xlu0 %953
    %955 = vrot.lane.b32.xlu0 %v905, 127
    %v956 = vpop.permute.xlu0 %955
    %957 = vrot.lane.b32.xlu0 %v909, 127
    %v958 = vpop.permute.xlu0 %957
    %v959 = vsel %vm263, %v944, %v952
    %v960 = vsel %vm263, %v946, %v954
    %v961 = vsel %vm263, %v948, %v956
    %v962 = vsel %vm263, %v950, %v958
    %v963 = vsel %vm263, %v952, %v944
    %v964 = vsel %vm263, %v954, %v946
    %v965 = vsel %vm263, %v956, %v948
    %v966 = vsel %vm263, %v958, %v950
    %v967 = vmul.f32 %v959, %v285
    %v968 = vmul.f32 %v963, %v289
    %v969 = vmul.f32 %v960, %v285
    %v970 = vmul.f32 %v964, %v289
    %v971 = vmul.f32 %v961, %v285
    %v972 = vmul.f32 %v965, %v289
    %v973 = vmul.f32 %v962, %v285
    %v974 = vmul.f32 %v966, %v289
    %v975 = vmul.f32 %v301, %v935
    %v976 = vmul.f32 %v301, %v936
    %v977 = vmul.f32 %v306, %v937
    %v978 = vmul.f32 %v306, %v938
    %v979 = vmul.f32 %v311, %v939
    %v980 = vmul.f32 %v311, %v940
    %v981 = vmul.f32 %v316, %v941
    %v982 = vmul.f32 %v316, %v942
    %v983 = vmul.f32 %v329, %v893
    %v984 = vmul.f32 %v329, %v895
    %v985 = vmul.f32 %v334, %v897
    %v986 = vmul.f32 %v334, %v899
    %v987 = vmul.f32 %v339, %v903
    %v988 = vmul.f32 %v339, %v905
    %v989 = vmul.f32 %v344, %v907
    %v990 = vmul.f32 %v344, %v909
    %v991 = vadd.f32 %v975, %v983
    %v992 = vadd.f32 %v976, %v984
    %v993 = vadd.f32 %v977, %v985
    %v994 = vadd.f32 %v978, %v986
    %v995 = vadd.f32 %v979, %v987
    %v996 = vadd.f32 %v980, %v988
    %v997 = vadd.f32 %v981, %v989
    %v998 = vadd.f32 %v982, %v990
    %v999 = vmul.f32 %v365, %v967
    %v1000 = vmul.f32 %v365, %v968
    %v1001 = vmul.f32 %v370, %v969
    %v1002 = vmul.f32 %v370, %v970
    %v1003 = vmul.f32 %v375, %v971
    %v1004 = vmul.f32 %v375, %v972
    %v1005 = vmul.f32 %v380, %v973
    %v1006 = vmul.f32 %v380, %v974
    %v1007 = vadd.f32 %v991, %v999
    %v1008 = vadd.f32 %v992, %v1000
    %v1009 = vadd.f32 %v993, %v1001
    %v1010 = vadd.f32 %v994, %v1002
    %v1011 = vadd.f32 %v995, %v1003
    %v1012 = vadd.f32 %v996, %v1004
    %v1013 = vadd.f32 %v997, %v1005
    %v1014 = vadd.f32 %v998, %v1006
    %v1015 = vadd.f32 %v1007, %v401
    %v1016 = vadd.f32 %v1008, %v401
    %v1017 = vadd.f32 %v1009, %v406
    %v1018 = vadd.f32 %v1010, %v406
    %v1019 = vadd.f32 %v1011, %v411
    %v1020 = vadd.f32 %v1012, %v411
    %v1021 = vadd.f32 %v1013, %v416
    %v1022 = vadd.f32 %v1014, %v416
    %v1023 = vmul.f32 %v429, %v935
    %v1024 = vmul.f32 %v429, %v936
    %v1025 = vmul.f32 %v434, %v937
    %v1026 = vmul.f32 %v434, %v938
    %v1027 = vmul.f32 %v439, %v939
    %v1028 = vmul.f32 %v439, %v940
    %v1029 = vmul.f32 %v444, %v941
    %v1030 = vmul.f32 %v444, %v942
    %v1031 = vmul.f32 %v457, %v893
    %v1032 = vmul.f32 %v457, %v895
    %v1033 = vmul.f32 %v462, %v897
    %v1034 = vmul.f32 %v462, %v899
    %v1035 = vmul.f32 %v467, %v903
    %v1036 = vmul.f32 %v467, %v905
    %v1037 = vmul.f32 %v472, %v907
    %v1038 = vmul.f32 %v472, %v909
    %v1039 = vadd.f32 %v1023, %v1031
    %v1040 = vadd.f32 %v1024, %v1032
    %v1041 = vadd.f32 %v1025, %v1033
    %v1042 = vadd.f32 %v1026, %v1034
    %v1043 = vadd.f32 %v1027, %v1035
    %v1044 = vadd.f32 %v1028, %v1036
    %v1045 = vadd.f32 %v1029, %v1037
    %v1046 = vadd.f32 %v1030, %v1038
    %v1047 = vmul.f32 %v493, %v967
    %v1048 = vmul.f32 %v493, %v968
    %v1049 = vmul.f32 %v498, %v969
    %v1050 = vmul.f32 %v498, %v970
    %v1051 = vmul.f32 %v503, %v971
    %v1052 = vmul.f32 %v503, %v972
    %v1053 = vmul.f32 %v508, %v973
    %v1054 = vmul.f32 %v508, %v974
    %v1055 = vadd.f32 %v1039, %v1047
    %v1056 = vadd.f32 %v1040, %v1048
    %v1057 = vadd.f32 %v1041, %v1049
    %v1058 = vadd.f32 %v1042, %v1050
    %v1059 = vadd.f32 %v1043, %v1051
    %v1060 = vadd.f32 %v1044, %v1052
    %v1061 = vadd.f32 %v1045, %v1053
    %v1062 = vadd.f32 %v1046, %v1054
    %1063 = vrot.lane.b32.xlu0 %v1055, 16
    %v1064 = vpop.permute.xlu0 %1063
    %1065 = vrot.lane.b32.xlu0 %v1057, 16
    %v1066 = vpop.permute.xlu0 %1065
    %1067 = vrot.lane.b32.xlu0 %v1059, 16
    %v1068 = vpop.permute.xlu0 %1067
    %1069 = vrot.lane.b32.xlu0 %v1061, 16
    %v1070 = vpop.permute.xlu0 %1069
    %1071 = vrot.lane.b32.xlu0 %v1056, 16
    %v1072 = vpop.permute.xlu0 %1071
    %1073 = vrot.lane.b32.xlu0 %v1058, 16
    %v1074 = vpop.permute.xlu0 %1073
    %1075 = vrot.lane.b32.xlu0 %v1060, 16
    %v1076 = vpop.permute.xlu0 %1075
    %1077 = vrot.lane.b32.xlu0 %v1062, 16
    %v1078 = vpop.permute.xlu0 %1077
    %v1079 = vsel %vm542, %v1064, %v1072
    %v1080 = vsel %vm542, %v1066, %v1074
    %v1081 = vsel %vm542, %v1068, %v1076
    %v1082 = vsel %vm542, %v1070, %v1078
    %v1083 = vsel %vm542, %v1072, %v1064
    %v1084 = vsel %vm542, %v1074, %v1066
    %v1085 = vsel %vm542, %v1076, %v1068
    %v1086 = vsel %vm542, %v1078, %v1070
    %v1087 = vmul.f32 %v1083, %v564
    %v1088 = vmul.f32 %v1079, %v568
    %v1089 = vmul.f32 %v1084, %v564
    %v1090 = vmul.f32 %v1080, %v568
    %v1091 = vmul.f32 %v1085, %v564
    %v1092 = vmul.f32 %v1081, %v568
    %v1093 = vmul.f32 %v1086, %v564
    %v1094 = vmul.f32 %v1082, %v568
    %v1095 = vadd.f32 %v1015, %v1087
    %v1096 = vadd.f32 %v1016, %v1088
    %v1097 = vadd.f32 %v1017, %v1089
    %v1098 = vadd.f32 %v1018, %v1090
    %v1099 = vadd.f32 %v1019, %v1091
    %v1100 = vadd.f32 %v1020, %v1092
    %v1101 = vadd.f32 %v1021, %v1093
    %v1102 = vadd.f32 %v1022, %v1094
    %v1103 = vmul.f32 %v588, %v935
    %v1104 = vmul.f32 %v588, %v936
    %v1105 = vmul.f32 %v593, %v937
    %v1106 = vmul.f32 %v593, %v938
    %v1107 = vmul.f32 %v598, %v939
    %v1108 = vmul.f32 %v598, %v940
    %v1109 = vmul.f32 %v603, %v941
    %v1110 = vmul.f32 %v603, %v942
    %v1111 = vmul.f32 %v616, %v893
    %v1112 = vmul.f32 %v616, %v895
    %v1113 = vmul.f32 %v621, %v897
    %v1114 = vmul.f32 %v621, %v899
    %v1115 = vmul.f32 %v626, %v903
    %v1116 = vmul.f32 %v626, %v905
    %v1117 = vmul.f32 %v631, %v907
    %v1118 = vmul.f32 %v631, %v909
    %v1119 = vadd.f32 %v1103, %v1111
    %v1120 = vadd.f32 %v1104, %v1112
    %v1121 = vadd.f32 %v1105, %v1113
    %v1122 = vadd.f32 %v1106, %v1114
    %v1123 = vadd.f32 %v1107, %v1115
    %v1124 = vadd.f32 %v1108, %v1116
    %v1125 = vadd.f32 %v1109, %v1117
    %v1126 = vadd.f32 %v1110, %v1118
    %v1127 = vmul.f32 %v652, %v967
    %v1128 = vmul.f32 %v652, %v968
    %v1129 = vmul.f32 %v657, %v969
    %v1130 = vmul.f32 %v657, %v970
    %v1131 = vmul.f32 %v662, %v971
    %v1132 = vmul.f32 %v662, %v972
    %v1133 = vmul.f32 %v667, %v973
    %v1134 = vmul.f32 %v667, %v974
    %v1135 = vadd.f32 %v1119, %v1127
    %v1136 = vadd.f32 %v1120, %v1128
    %v1137 = vadd.f32 %v1121, %v1129
    %v1138 = vadd.f32 %v1122, %v1130
    %v1139 = vadd.f32 %v1123, %v1131
    %v1140 = vadd.f32 %v1124, %v1132
    %v1141 = vadd.f32 %v1125, %v1133
    %v1142 = vadd.f32 %v1126, %v1134
    %1143 = vrot.lane.b32.xlu0 %v1135, 112
    %v1144 = vpop.permute.xlu0 %1143
    %1145 = vrot.lane.b32.xlu0 %v1137, 112
    %v1146 = vpop.permute.xlu0 %1145
    %1147 = vrot.lane.b32.xlu0 %v1139, 112
    %v1148 = vpop.permute.xlu0 %1147
    %1149 = vrot.lane.b32.xlu0 %v1141, 112
    %v1150 = vpop.permute.xlu0 %1149
    %1151 = vrot.lane.b32.xlu0 %v1136, 112
    %v1152 = vpop.permute.xlu0 %1151
    %1153 = vrot.lane.b32.xlu0 %v1138, 112
    %v1154 = vpop.permute.xlu0 %1153
    %1155 = vrot.lane.b32.xlu0 %v1140, 112
    %v1156 = vpop.permute.xlu0 %1155
    %1157 = vrot.lane.b32.xlu0 %v1142, 112
    %v1158 = vpop.permute.xlu0 %1157
    %v1159 = vsel %vm701, %v1144, %v1152
    %v1160 = vsel %vm701, %v1146, %v1154
    %v1161 = vsel %vm701, %v1148, %v1156
    %v1162 = vsel %vm701, %v1150, %v1158
    %v1163 = vsel %vm701, %v1152, %v1144
    %v1164 = vsel %vm701, %v1154, %v1146
    %v1165 = vsel %vm701, %v1156, %v1148
    %v1166 = vsel %vm701, %v1158, %v1150
    %v1167 = vmul.f32 %v1159, %v723
    %v1168 = vmul.f32 %v1163, %v727
    %v1169 = vmul.f32 %v1160, %v723
    %v1170 = vmul.f32 %v1164, %v727
    %v1171 = vmul.f32 %v1161, %v723
    %v1172 = vmul.f32 %v1165, %v727
    %v1173 = vmul.f32 %v1162, %v723
    %v1174 = vmul.f32 %v1166, %v727
    %v1175 = vadd.f32 %v1095, %v1167
    %v1176 = vadd.f32 %v1096, %v1168
    %v1177 = vadd.f32 %v1097, %v1169
    %v1178 = vadd.f32 %v1098, %v1170
    %v1179 = vadd.f32 %v1099, %v1171
    %v1180 = vadd.f32 %v1100, %v1172
    %v1181 = vadd.f32 %v1101, %v1173
    %v1182 = vadd.f32 %v1102, %v1174
    %v1183 = vmul.f32 %v1175, %v1175
    %v1184 = vmul.f32 %v1176, %v1176
    %v1185 = vmul.f32 %v1177, %v1177
    %v1186 = vmul.f32 %v1178, %v1178
    %v1187 = vmul.f32 %v1175, %v1183
    %v1188 = vmul.f32 %v1176, %v1184
    %v1189 = vmul.f32 %v1177, %v1185
    %v1190 = vmul.f32 %v1178, %v1186
    %v1191 = vmul.f32 %v1187, 0.044715
    %v1192 = vmul.f32 %v1188, 0.044715
    %v1193 = vmul.f32 %v1189, 0.044715
    %v1194 = vmul.f32 %v1190, 0.044715
    %v1195 = vadd.f32 %v1175, %v1191
    %v1196 = vadd.f32 %v1176, %v1192
    %v1197 = vadd.f32 %v1177, %v1193
    %v1198 = vadd.f32 %v1178, %v1194
    %v1199 = vmul.f32 %v1195, 0.7978846
    %v1200 = vmul.f32 %v1196, 0.7978846
    %v1201 = vmul.f32 %v1197, 0.7978846
    %v1202 = vmul.f32 %v1198, 0.7978846
    %v1203 = vtanh.pop %v1199
    %v1204 = vtanh.pop %v1200
    %v1205 = vtanh.pop %v1201
    %v1206 = vtanh.pop %v1202
    %v1207 = vadd.f32 %v1203, 1.0
    %v1208 = vadd.f32 %v1204, 1.0
    %v1209 = vadd.f32 %v1205, 1.0
    %v1210 = vadd.f32 %v1206, 1.0
    %v1211 = vmul.f32 %v1207, 0.5
    %v1212 = vmul.f32 %v1208, 0.5
    %v1213 = vmul.f32 %v1209, 0.5
    %v1214 = vmul.f32 %v1210, 0.5
    %v1215 = vmul.f32 %v1175, %v1211
    %v1216 = vmul.f32 %v1176, %v1212
    %v1217 = vmul.f32 %v1177, %v1213
    %v1218 = vmul.f32 %v1178, %v1214
    %v1219 = vmul.f32 %v1215, %v1179
    %v1220 = vmul.f32 %v1216, %v1180
    %v1221 = vmul.f32 %v1217, %v1181
    %v1222 = vmul.f32 %v1218, %v1182
    %v1223 = vpack.c.bf16 %v1221, %v1219
    %v1224 = vpack.c.bf16 %v1222, %v1220
    %1225 = vmatprep.subr.bf16.mxu0 %v1224
    %1226 = vmatpush1.bf16.msra.mxu0 %v1223
    %1227 = vmatprep.subr.bf16.mxu0 0
    %1228 = vmatpush1.bf16.msra.mxu0 0
    %1229 = vmatprep.subr.bf16.mxu0 0
    %1230 = vmatpush1.bf16.msra.mxu0 0
    %1231 = vmatprep.subr.bf16.mxu0 0
    %1232 = vmatpush1.bf16.msra.mxu0 0
    %1233 = vmatprep.subr.bf16.mxu0 0
    %1234 = vmatpush1.bf16.msra.mxu0 0
    %1235 = vmatprep.subr.bf16.mxu0 0
    %1236 = vmatpush1.bf16.msra.mxu0 0
    %1237 = vmatprep.subr.bf16.mxu0 0
    %1238 = vmatpush1.bf16.msra.mxu0 0
    %1239 = vmatprep.subr.bf16.mxu0 0
    %1240 = vmatpush1.bf16.msra.mxu0 0
    %1241 = vmatprep.subr.bf16.mxu0 0
    %1242 = vmatpush1.bf16.msra.mxu0 0
    %1243 = vmatprep.subr.bf16.mxu0 0
    %1244 = vmatpush1.bf16.msra.mxu0 0
    %1245 = vmatprep.subr.bf16.mxu0 0
    %1246 = vmatpush1.bf16.msra.mxu0 0
    %1247 = vmatprep.subr.bf16.mxu0 0
    %1248 = vmatpush1.bf16.msra.mxu0 0
    %1249 = vmatprep.subr.bf16.mxu0 0
    %1250 = vmatpush1.bf16.msra.mxu0 0
    %1251 = vmatprep.subr.bf16.mxu0 0
    %1252 = vmatpush1.bf16.msra.mxu0 0
    %1253 = vmatprep.subr.bf16.mxu0 0
    %1254 = vmatpush1.bf16.msra.mxu0 0
    %1255 = vmatprep.subr.bf16.mxu0 0
    %1256 = vmatpush1.bf16.msra.mxu0 0
    %1257 = vmatprep.mubr.bf16.mxu0 0
    %1258 = vmatmul.mubr.bf16.gmra.mrb[0].mxu0 %v793
    %v1259 = vpop.f32.mrb[0].mxu0
    %v1260 = vadd.f32 %v789, %v1259
    %v1261 = vpop.f32.mrb[0].mxu0
    %v1262 = vadd.f32 %v789, %v1261
    %v1263 = vpop.f32.mrb[0].mxu0
    %v1264 = vpop.f32.mrb[0].mxu0
    %1265 = vdwg.mxu0
    %v1266 = vpack.c.bf16 %v1260, %v1260
    %v1267 = vpack.c.bf16 %v1262, %v1262
    %v1270 = vunpack.c.l.b16 %v1266
    %v1271 = vunpack.c.l.b16 %v1267
    %v1272 = vpack.c.b16 %v1271, %v1270
    %s1274 = scalar_lea.vmem [#allocation2], 8
    %1275 = vst [vmem:[%s1274] sm:$0xff] %v1272
    // Predicated region
    $region34: #{tpu_custom_call.1} parent=1 // pred_check
      _
    $region35: #{tpu_custom_call.1} parent=1 // pred_check_branch
      %1277 = sbr.rel (0) target = $region37
    $region36: #{tpu_custom_call.1} parent=1 // pred_region
      %s1279 = ssub.s32 256, 256
      %1280 = vsyncadd [#allocation3], %s1279
      %s1281 = sshll.u32 [#allocation2], 4
      %s1282 = int_to_ptr.vmem [resolvable:$true] %s1281
      %1287 = dma.vmem_to_hbm [thread:$0]  %s1282, 256, %s8, [#allocation3], 128, 128, 8
    $region37: #{tpu_custom_call.1} parent=1 // pred_fallthru
      _
    // Predicated region
    $region38: #{tpu_custom_call.1} parent=1 // pred_check
      _
    $region39: #{tpu_custom_call.1} parent=1 // pred_check_branch
      %1289 = sbr.rel (0) target = $region41
    $region40: #{tpu_custom_call.1} parent=1 // pred_region
      %1290 = dma.done [#allocation3], 256
    $region41: #{tpu_custom_call.1} parent=1 // pred_fallthru
      _
    %1291 = vsyncpa [#allocation3], 1

</llo_original>
